<compile_context>
chip_gen: v7x
topology: tpu7x:2x2x1
jax: 0.10.0
libtpu: 0.0.40
codegen_flags: <defaults>
</compile_context>

<pallas_src>
import functools

import numpy as np

import jax
import jax.numpy as jnp
from jax import lax
from jax.experimental import pallas as pl
from jax.experimental.pallas import tpu as pltpu


def _round_up(x, m):
    return ((x + m - 1) // m) * m


def mhsa_kernel(x_ref, dww_ref, dwb_ref, pww_ref, pwb_ref, lng_ref, lnb_ref,
                wo_ref, *rest, Bb, L, C, heads, ksize, stride, p_drop,
                Lk_pad, matmul_bf16, eps=1e-5):
    # rest = [amask_ref, omask_ref,] out_ref, attn_ref, xp_sc, o_sc
    if p_drop > 0.0:
        amask_ref, omask_ref, out_ref, attn_ref, xp_sc, o_sc = rest
    else:
        out_ref, attn_ref, xp_sc, o_sc = rest

    Lr = L - 1
    pad = (ksize - 1) // 2                        # odd ksize => symmetric 'same' pad
    Lo = Lr if stride == 1 else (Lr + 2 * pad - ksize) // stride + 1
    Lk = 1 + Lo
    dh = C // heads
    att_dtype = jnp.bfloat16 if matmul_bf16 else jnp.float32
    w_dtype = pww_ref.dtype                       # weights pre-cast host-side

    x = x_ref[...].astype(jnp.float32)            # (Bb, L, C)
    cls = x[:, 0:1, :]                            # (Bb, 1, C)  cls token

    # Stage the zero-padded patch tokens once in VMEM scratch; every depthwise
    # tap (stride 1 or s) is then a (possibly strided) read of this scratch.
    if pad > 0:
        zp = jnp.zeros((Bb, pad, C), jnp.float32)
        xp_sc[:, 0:pad, :] = zp
        xp_sc[:, pad + Lr:pad + Lr + pad, :] = zp
    xp_sc[:, pad:pad + Lr, :] = x[:, 1:, :]

    dww = dww_ref[...].astype(jnp.float32)        # (3, ksize, C) depthwise weights
    dwb = dwb_ref[...].astype(jnp.float32)        # (3, 1, C)     depthwise bias
    lng = lng_ref[...].astype(jnp.float32)        # (3, 1, C)     LayerNorm gamma
    lnb = lnb_ref[...].astype(jnp.float32)        # (3, 1, C)     LayerNorm beta

    def dsconv_ln(idx, s, Lout):
        # Depthwise conv evaluated directly at the (strided) output positions.
        acc = None
        for j in range(ksize):
            if s == 1:
                tap = xp_sc[:, pl.ds(j, Lout), :]
            else:
                tap = xp_sc[:, pl.ds(j, Lout, stride=s), :]
            term = tap * dww[idx, j][None, None]
            acc = term if acc is None else acc + term
        acc = acc + dwb[idx][None]
        # Pointwise (1x1) conv: one collapsed 2D MXU matmul over (Bb*Lout, C).
        y = jnp.dot(acc.reshape(Bb * Lout, C).astype(w_dtype), pww_ref[idx],
                    preferred_element_type=jnp.float32).reshape(Bb, Lout, C)
        y = y + pwb_ref[idx][None]
        # LayerNorm over channels (eps=1e-5, biased variance, affine).
        mu = jnp.mean(y, axis=-1, keepdims=True)
        var = jnp.mean(jnp.square(y - mu), axis=-1, keepdims=True)
        return (y - mu) * lax.rsqrt(var + eps) * lng[idx][None] + lnb[idx][None]

    q = dsconv_ln(0, 1, Lr)                       # (Bb, Lr, C)
    k = dsconv_ln(1, stride, Lo)                  # (Bb, Lo, C)
    v = dsconv_ln(2, stride, Lo)                  # (Bb, Lo, C)

    qf = jnp.concatenate([cls, q], axis=1)        # (Bb, L, C)
    pad_k = Lk_pad - Lk
    if pad_k > 0:
        kz = jnp.zeros((Bb, pad_k, C), jnp.float32)
        kf = jnp.concatenate([cls, k, kz], axis=1)     # (Bb, Lk_pad, C)
        vf = jnp.concatenate([cls, v, kz], axis=1)     # (Bb, Lk_pad, C)
        col_ok = lax.broadcasted_iota(jnp.int32, (1, L, Lk_pad), 2) < Lk
    else:
        kf = jnp.concatenate([cls, k], axis=1)
        vf = jnp.concatenate([cls, v], axis=1)
        col_ok = None

    scale = 1.0 / float(dh) ** 0.5
    # TODO(synk): at ViT scale, chunk over heads / query rows (lax.fori_loop or
    # an extra grid axis) to bound f32 live ranges instead of this static loop.
    for h in range(heads):
        cs = slice(h * dh, (h + 1) * dh)
        qh = qf[:, :, cs].astype(att_dtype)       # (Bb, L,      dh)
        kh = kf[:, :, cs].astype(att_dtype)       # (Bb, Lk_pad, dh)
        vh = vf[:, :, cs].astype(att_dtype)       # (Bb, Lk_pad, dh)
        dots = jnp.einsum('bqd,bkd->bqk', qh, kh,
                          preferred_element_type=jnp.float32) * scale
        if col_ok is not None:
            dots = jnp.where(col_ok, dots, -1e30)  # mask padded key columns
        dots = dots - jnp.max(dots, axis=-1, keepdims=True)
        e = jnp.exp(dots)
        attn = e / jnp.sum(e, axis=-1, keepdims=True)   # exact softmax
        if p_drop > 0.0:
            attn = attn * amask_ref[h]            # pre-scaled keep mask
        attn_ref[h] = attn                        # lane-dense (Lk_pad) store
        oh = jnp.einsum('bqk,bkd->bqd', attn.astype(att_dtype), vh,
                        preferred_element_type=jnp.float32)
        o_sc[:, :, cs] = oh                       # head merge via scratch store

    # Output projection (w_o, bias-free) as one collapsed 2D MXU matmul.
    o = o_sc[...]
    out = jnp.dot(o.reshape(Bb * L, C).astype(w_dtype), wo_ref[...],
                  preferred_element_type=jnp.float32).reshape(Bb, L, C)
    if p_drop > 0.0:
        out = out * omask_ref[...]
    out_ref[...] = out.astype(out_ref.dtype)


def _pick_block_b(B, L, C, heads, Lk_pad, pad, ksize, has_drop,
                  vmem_budget=40 * 1024 * 1024):
    """Generation-aware block_b: fit a rough per-step VMEM estimate and keep
    at least 2 grid steps so the 'parallel' batch axis can span both
    TensorCores on v7x."""
    Lp = (L - 1) + 2 * pad
    wbytes = 2 * 4 * (3 * ksize * C + 9 * C + 4 * C * C)   # params (2x-buffered)

    def est(bb):
        b = 2 * 4 * bb * L * C                    # x block
        b += 2 * 4 * bb * L * C                   # out block
        b += 2 * 4 * heads * bb * L * Lk_pad      # attn block
        if has_drop:
            b += 2 * 4 * (heads * bb * L * Lk_pad + bb * L * C)
        b += 4 * (bb * Lp * C + bb * L * C)       # scratches
        b += 4 * (4 * bb * L * C + 3 * bb * L * Lk_pad)     # live intermediates
        return b + wbytes

    divisors = [d for d in range(1, B + 1) if B % d == 0]
    fitting = [d for d in divisors if est(d) <= vmem_budget] or [1]
    multi = [d for d in fitting if B // d >= 2]
    return max(multi) if multi else max(fitting)


def mhsa_forward(x, params, *, num_heads, kernel_size, stride, dropout_ratio,
                 seed=0, block_b=None, matmul_bf16=False):
    B, L, C = x.shape
    assert kernel_size % 2 == 1, "odd kernel_size required"
    # TODO(synk): PyTorch 'same' padding with an even kernel is asymmetric; not handled.
    assert C % num_heads == 0
    Lr = L - 1
    pad = (kernel_size - 1) // 2
    Lo = Lr if stride == 1 else (Lr + 2 * pad - kernel_size) // stride + 1
    Lk = 1 + Lo
    Lk_pad = _round_up(Lk, 128)                   # lane-dense attention stores
    p = float(dropout_ratio)
    has_drop = p > 0.0

    if block_b is None:
        block_b = _pick_block_b(B, L, C, num_heads, Lk_pad, pad, kernel_size,
                                has_drop)
    assert B % block_b == 0
    Bb, nb = block_b, B // block_b

    dww, dwb, pww, pwb, lng, lnb, wo = params
    if matmul_bf16:                               # pre-cast weights host-side
        pww = pww.astype(jnp.bfloat16)
        wo = wo.astype(jnp.bfloat16)

    kern = functools.partial(
        mhsa_kernel, Bb=Bb, L=L, C=C, heads=num_heads, ksize=kernel_size,
        stride=stride, p_drop=p, Lk_pad=Lk_pad, matmul_bf16=matmul_bf16)

    const3 = lambda b: (0, 0, 0)
    const2 = lambda b: (0, 0)
    # TODO(synk): constant-index weight inputs could be single-buffered
    # (pipeline_mode=pl.Buffered(1)) to save VMEM at ViT scale on v7x.
    in_specs = [
        pl.BlockSpec((Bb, L, C), lambda b: (b, 0, 0)),
        pl.BlockSpec(dww.shape, const3),
        pl.BlockSpec(dwb.shape, const3),
        pl.BlockSpec(pww.shape, const3),
        pl.BlockSpec(pwb.shape, const3),
        pl.BlockSpec(lng.shape, const3),
        pl.BlockSpec(lnb.shape, const3),
        pl.BlockSpec(wo.shape, const2),
    ]
    args = [x, dww, dwb, pww, pwb, lng, lnb, wo]

    if has_drop:
        # MC-dropout keep-masks generated host-side (pltpu.prng_* has no
        # CPU/interpret lowering).  Pre-scaled by 1/(1-p); 0 where dropped.
        keep = 1.0 - p
        ka, ko = jax.random.split(jax.random.PRNGKey(seed))
        amask = jax.random.bernoulli(
            ka, keep, (num_heads, B, L, Lk_pad)).astype(jnp.float32) * (1.0 / keep)
        omask = jax.random.bernoulli(
            ko, keep, (B, L, C)).astype(jnp.float32) * (1.0 / keep)
        in_specs += [
            pl.BlockSpec((num_heads, Bb, L, Lk_pad), lambda b: (0, b, 0, 0)),
            pl.BlockSpec((Bb, L, C), lambda b: (b, 0, 0)),
        ]
        args += [amask, omask]

    grid_spec = pltpu.PrefetchScalarGridSpec(
        num_scalar_prefetch=0,
        grid=(nb,),
        in_specs=in_specs,
        out_specs=[
            pl.BlockSpec((Bb, L, C), lambda b: (b, 0, 0)),
            pl.BlockSpec((num_heads, Bb, L, Lk_pad), lambda b: (0, b, 0, 0)),
        ],
        scratch_shapes=[
            pltpu.VMEM((Bb, Lr + 2 * pad, C), jnp.float32),   # padded tokens
            pltpu.VMEM((Bb, L, C), jnp.float32),              # merged head out
        ],
    )

    out, attn_p = pl.pallas_call(
        kern,
        grid_spec=grid_spec,
        out_shape=(jax.ShapeDtypeStruct((B, L, C), x.dtype),
                   jax.ShapeDtypeStruct((num_heads, B, L, Lk_pad), jnp.float32)),
        compiler_params=pltpu.CompilerParams(
            # batch blocks are fully independent -> shard across TensorCores
            dimension_semantics=("parallel",),
            vmem_limit_bytes=48 * 1024 * 1024),
    )(*args)

    # Host-side: head axis back to dim 1 and drop the lane padding of Lk.
    attn = jnp.transpose(attn_p, (1, 0, 2, 3))[:, :, :, :Lk]
    return out, attn


def mhsa_reference(x, params, *, num_heads, kernel_size, stride):
    """Pure-JAX reference (dropout disabled), mirroring the PyTorch module."""
    dww, dwb, pww, pwb, lng, lnb, wo = params
    B, L, C = x.shape
    Lr = L - 1
    pad = (kernel_size - 1) // 2
    Lo = Lr if stride == 1 else (Lr + 2 * pad - kernel_size) // stride + 1
    cls, xr = x[:, :1, :], x[:, 1:, :]
    xp = jnp.pad(xr, ((0, 0), (pad, pad), (0, 0)))

    def dsconv_ln(idx, s):
        acc = sum(xp[:, j:j + Lr, :] * dww[idx, j][None, None, :]
                  for j in range(kernel_size)) + dwb[idx][None]
        if s > 1:
            acc = acc[:, ::s, :][:, :Lo, :]
        y = jnp.einsum('blc,cd->bld', acc, pww[idx]) + pwb[idx][None]
        mu = y.mean(-1, keepdims=True)
        var = ((y - mu) ** 2).mean(-1, keepdims=True)
        return (y - mu) / jnp.sqrt(var + 1e-5) * lng[idx][None] + lnb[idx][None]

    q = jnp.concatenate([cls, dsconv_ln(0, 1)], axis=1)
    k = jnp.concatenate([cls, dsconv_ln(1, stride)], axis=1)
    v = jnp.concatenate([cls, dsconv_ln(2, stride)], axis=1)
    dh = C // num_heads

    def split(t):
        return t.reshape(t.shape[0], t.shape[1], num_heads, dh).transpose(0, 2, 1, 3)

    qh, kh, vh = split(q), split(k), split(v)
    dots = jnp.einsum('bhqd,bhkd->bhqk', qh, kh) / (dh ** 0.5)
    attn = jax.nn.softmax(dots, axis=-1)
    o = jnp.einsum('bhqk,bhkd->bhqd', attn, vh)
    o = o.transpose(0, 2, 1, 3).reshape(B, L, C)
    return o @ wo, attn


def init_params(key, C, kernel_size):
    """Deterministic synthetic parameters with the shapes implied by __init__."""
    ks = jax.random.split(key, 5)
    # depthwise Conv1d weight (C, 1, k) -> stored as (3[qkv], k, C)
    dww = jax.random.normal(ks[0], (3, kernel_size, C), jnp.float32) * 0.1
    dwb = jax.random.normal(ks[1], (3, 1, C), jnp.float32) * 0.1
    # pointwise Conv1d weight (Cout, Cin, 1) -> pre-transposed to (3, Cin, Cout)
    pww = jax.random.normal(ks[2], (3, C, C), jnp.float32) * (1.0 / np.sqrt(C))
    pwb = jax.random.normal(ks[3], (3, 1, C), jnp.float32) * 0.1
    # LayerNorm params (default init)
    lng = jnp.ones((3, 1, C), jnp.float32)
    lnb = jnp.zeros((3, 1, C), jnp.float32)
    # w_o: nn.Linear(C, C, bias=False) weight (C, C) -> pre-transposed (Cin, Cout)
    wo = jax.random.normal(ks[4], (C, C), jnp.float32) * (1.0 / np.sqrt(C))
    return dww, dwb, pww, pwb, lng, lnb, wo


if __name__ == "__main__":
    key = jax.random.PRNGKey(0)
    kx, kp = jax.random.split(key)

    # small shapes: batch=2, seq=9 (1 cls + 8 patch tokens), channels=32, heads=4
    B, L, C = 2, 9, 32
    num_heads, kernel_size, stride, dropout_ratio = 4, 3, 2, 0.1

    x = jax.random.normal(kx, (B, L, C), jnp.float32)
    params = init_params(kp, C, kernel_size)

    Lr = L - 1
    pad = (kernel_size - 1) // 2
    Lo = (Lr + 2 * pad - kernel_size) // stride + 1
    Lk = 1 + Lo

    # 1) numerics check against a pure-JAX reference (dropout disabled so the
    #    comparison is deterministic).  Tolerances are loose because TPU
    #    matmuls run at default (reduced) precision.
    out0, attn0 = mhsa_forward(x, params, num_heads=num_heads,
                               kernel_size=kernel_size, stride=stride,
                               dropout_ratio=0.0, seed=0)
    out_r, attn_r = mhsa_reference(x, params, num_heads=num_heads,
                                   kernel_size=kernel_size, stride=stride)
    jax.block_until_ready((out0, attn0))
    np.testing.assert_allclose(np.asarray(attn0), np.asarray(attn_r), atol=0.05)
    np.testing.assert_allclose(np.asarray(out0), np.asarray(out_r),
                               rtol=0.1, atol=0.1)
    row_sums = np.asarray(attn0).sum(-1)
    assert np.max(np.abs(row_sums - 1.0)) < 1e-2

    # 2) full forward with MC-dropout active and bf16 matmul operands enabled
    out, attn = mhsa_forward(x, params, num_heads=num_heads,
                             kernel_size=kernel_size, stride=stride,
                             dropout_ratio=dropout_ratio, seed=1234,
                             matmul_bf16=True)
    jax.block_until_ready((out, attn))
    assert out.shape == (B, L, C)
    assert attn.shape == (B, num_heads, L, Lk)
    assert bool(jnp.all(jnp.isfinite(out))) and bool(jnp.all(jnp.isfinite(attn)))
    print("KERNEL_OK")
</pallas_src>

<mosaic_0001>
module attributes {stable_mosaic.version = 11 : i64} {
  func.func @mhsa_kernel(%arg0: i32, %arg1: memref<1x9x32xf32, #tpu.memory_space<vmem>>, %arg2: memref<3x3x32xf32, #tpu.memory_space<vmem>>, %arg3: memref<3x1x32xf32, #tpu.memory_space<vmem>>, %arg4: memref<3x32x32xf32, #tpu.memory_space<vmem>>, %arg5: memref<3x1x32xf32, #tpu.memory_space<vmem>>, %arg6: memref<3x1x32xf32, #tpu.memory_space<vmem>>, %arg7: memref<3x1x32xf32, #tpu.memory_space<vmem>>, %arg8: memref<32x32xf32, #tpu.memory_space<vmem>>, %arg9: memref<1x9x32xf32, #tpu.memory_space<vmem>>, %arg10: memref<4x1x9x128xf32, #tpu.memory_space<vmem>>, %arg11: memref<1x10x32xf32, #tpu.memory_space<vmem>>, %arg12: memref<1x9x32xf32, #tpu.memory_space<vmem>>) attributes {dimension_semantics = [#tpu.dimension_semantics<parallel>], iteration_bounds = array<i64: 2>, scalar_prefetch = 0 : i64, scratch_operands = 2 : i64, tpu.core_type = #tpu.core_type<tc>, window_params = [{transform_indices = @transform_0, window_bounds = array<i64: 1, 9, 32>}, {pipeline_mode = #tpu.pipeline_mode<synchronous>, transform_indices = @transform_1, window_bounds = array<i64: 3, 3, 32>}, {pipeline_mode = #tpu.pipeline_mode<synchronous>, transform_indices = @transform_2, window_bounds = array<i64: 3, 1, 32>}, {pipeline_mode = #tpu.pipeline_mode<synchronous>, transform_indices = @transform_3, window_bounds = array<i64: 3, 32, 32>}, {pipeline_mode = #tpu.pipeline_mode<synchronous>, transform_indices = @transform_4, window_bounds = array<i64: 3, 1, 32>}, {pipeline_mode = #tpu.pipeline_mode<synchronous>, transform_indices = @transform_5, window_bounds = array<i64: 3, 1, 32>}, {pipeline_mode = #tpu.pipeline_mode<synchronous>, transform_indices = @transform_6, window_bounds = array<i64: 3, 1, 32>}, {pipeline_mode = #tpu.pipeline_mode<synchronous>, transform_indices = @transform_7, window_bounds = array<i64: 32, 32>}, {transform_indices = @transform_8, window_bounds = array<i64: 1, 9, 32>}, {transform_indices = @transform_9, window_bounds = array<i64: 4, 1, 9, 128>}]} {
    %c0 = arith.constant 0 : index
    %c0_0 = arith.constant 0 : index
    %c0_1 = arith.constant 0 : index
    %0 = vector.load %arg1[%c0, %c0_0, %c0_1] : memref<1x9x32xf32, #tpu.memory_space<vmem>>, vector<1x9x32xf32>
    %1 = vector.extract_strided_slice %0 {offsets = [0, 0, 0], sizes = [1, 1, 32], strides = [1, 1, 1]} : vector<1x9x32xf32> to vector<1x1x32xf32>
    %cst = arith.constant 0.000000e+00 : f32
    %2 = vector.broadcast %cst : f32 to vector<1x1x32xf32>
    %c0_2 = arith.constant 0 : index
    %c0_3 = arith.constant 0 : index
    %c0_4 = arith.constant 0 : index
    %3 = vector.load %arg11[%c0_2, %c0_3, %c0_4] : memref<1x10x32xf32, #tpu.memory_space<vmem>>, vector<1x1x32xf32>
    tpu.vector_store %arg11[%c0_2, %c0_3, %c0_4], %2 {strides = array<i32>} : memref<1x10x32xf32, #tpu.memory_space<vmem>>, vector<1x1x32xf32>,
    %c0_5 = arith.constant 0 : index
    %c9 = arith.constant 9 : index
    %c0_6 = arith.constant 0 : index
    %4 = vector.load %arg11[%c0_5, %c9, %c0_6] : memref<1x10x32xf32, #tpu.memory_space<vmem>>, vector<1x1x32xf32>
    tpu.vector_store %arg11[%c0_5, %c9, %c0_6], %2 {strides = array<i32>} : memref<1x10x32xf32, #tpu.memory_space<vmem>>, vector<1x1x32xf32>,
    %5 = vector.extract_strided_slice %0 {offsets = [0, 1, 0], sizes = [1, 8, 32], strides = [1, 1, 1]} : vector<1x9x32xf32> to vector<1x8x32xf32>
    %c0_7 = arith.constant 0 : index
    %c1 = arith.constant 1 : index
    %c0_8 = arith.constant 0 : index
    %6 = vector.load %arg11[%c0_7, %c1, %c0_8] : memref<1x10x32xf32, #tpu.memory_space<vmem>>, vector<1x8x32xf32>
    tpu.vector_store %arg11[%c0_7, %c1, %c0_8], %5 {strides = array<i32>} : memref<1x10x32xf32, #tpu.memory_space<vmem>>, vector<1x8x32xf32>,
    %c0_9 = arith.constant 0 : index
    %c0_10 = arith.constant 0 : index
    %c0_11 = arith.constant 0 : index
    %7 = vector.load %arg2[%c0_9, %c0_10, %c0_11] : memref<3x3x32xf32, #tpu.memory_space<vmem>>, vector<3x3x32xf32>
    %c0_12 = arith.constant 0 : index
    %c0_13 = arith.constant 0 : index
    %c0_14 = arith.constant 0 : index
    %8 = vector.load %arg3[%c0_12, %c0_13, %c0_14] : memref<3x1x32xf32, #tpu.memory_space<vmem>>, vector<3x1x32xf32>
    %c0_15 = arith.constant 0 : index
    %c0_16 = arith.constant 0 : index
    %c0_17 = arith.constant 0 : index
    %9 = vector.load %arg6[%c0_15, %c0_16, %c0_17] : memref<3x1x32xf32, #tpu.memory_space<vmem>>, vector<3x1x32xf32>
    %c0_18 = arith.constant 0 : index
    %c0_19 = arith.constant 0 : index
    %c0_20 = arith.constant 0 : index
    %10 = vector.load %arg7[%c0_18, %c0_19, %c0_20] : memref<3x1x32xf32, #tpu.memory_space<vmem>>, vector<3x1x32xf32>
    %c0_21 = arith.constant 0 : index
    %c0_22 = arith.constant 0 : index
    %c0_23 = arith.constant 0 : index
    %11 = vector.load %arg11[%c0_21, %c0_22, %c0_23] : memref<1x10x32xf32, #tpu.memory_space<vmem>>, vector<1x8x32xf32>
    %12 = vector.extract_strided_slice %7 {offsets = [0, 0, 0], sizes = [1, 1, 32], strides = [1, 1, 1]} : vector<3x3x32xf32> to vector<1x1x32xf32>
    %13 = vector.shape_cast %12 : vector<1x1x32xf32> to vector<32xf32>
    %14 = vector.shape_cast %13 : vector<32xf32> to vector<1x1x32xf32>
    %15 = vector.broadcast %14 : vector<1x1x32xf32> to vector<1x8x32xf32>
    %16 = arith.mulf %11, %15 : vector<1x8x32xf32>
    %c0_24 = arith.constant 0 : index
    %c1_25 = arith.constant 1 : index
    %c0_26 = arith.constant 0 : index
    %17 = vector.load %arg11[%c0_24, %c1_25, %c0_26] : memref<1x10x32xf32, #tpu.memory_space<vmem>>, vector<1x8x32xf32>
    %18 = vector.extract_strided_slice %7 {offsets = [0, 1, 0], sizes = [1, 1, 32], strides = [1, 1, 1]} : vector<3x3x32xf32> to vector<1x1x32xf32>
    %19 = vector.shape_cast %18 : vector<1x1x32xf32> to vector<32xf32>
    %20 = vector.shape_cast %19 : vector<32xf32> to vector<1x1x32xf32>
    %21 = vector.broadcast %20 : vector<1x1x32xf32> to vector<1x8x32xf32>
    %22 = arith.mulf %17, %21 : vector<1x8x32xf32>
    %23 = arith.addf %16, %22 : vector<1x8x32xf32>
    %c0_27 = arith.constant 0 : index
    %c2 = arith.constant 2 : index
    %c0_28 = arith.constant 0 : index
    %24 = vector.load %arg11[%c0_27, %c2, %c0_28] : memref<1x10x32xf32, #tpu.memory_space<vmem>>, vector<1x8x32xf32>
    %25 = vector.extract_strided_slice %7 {offsets = [0, 2, 0], sizes = [1, 1, 32], strides = [1, 1, 1]} : vector<3x3x32xf32> to vector<1x1x32xf32>
    %26 = vector.shape_cast %25 : vector<1x1x32xf32> to vector<32xf32>
    %27 = vector.shape_cast %26 : vector<32xf32> to vector<1x1x32xf32>
    %28 = vector.broadcast %27 : vector<1x1x32xf32> to vector<1x8x32xf32>
    %29 = arith.mulf %24, %28 : vector<1x8x32xf32>
    %30 = arith.addf %23, %29 : vector<1x8x32xf32>
    %31 = vector.extract_strided_slice %8 {offsets = [0, 0, 0], sizes = [1, 1, 32], strides = [1, 1, 1]} : vector<3x1x32xf32> to vector<1x1x32xf32>
    %32 = vector.shape_cast %31 : vector<1x1x32xf32> to vector<1x32xf32>
    %33 = vector.shape_cast %32 : vector<1x32xf32> to vector<1x1x32xf32>
    %34 = vector.broadcast %33 : vector<1x1x32xf32> to vector<1x8x32xf32>
    %35 = arith.addf %30, %34 : vector<1x8x32xf32>
    %36 = vector.shape_cast %35 : vector<1x8x32xf32> to vector<8x32xf32>
    %c0_29 = arith.constant 0 : index
    %c0_30 = arith.constant 0 : index
    %c0_31 = arith.constant 0 : index
    %37 = vector.load %arg4[%c0_29, %c0_30, %c0_31] : memref<3x32x32xf32, #tpu.memory_space<vmem>>, vector<1x32x32xf32>
    %38 = vector.shape_cast %37 : vector<1x32x32xf32> to vector<32x32xf32>
    %cst_32 = arith.constant dense<0.000000e+00> : vector<8x32xf32>
    %39 = tpu.matmul %36, %38, %cst_32 {dimension_numbers = #tpu.dot_dimension_numbers<[1], [0], [0], [1], [0, 0, 1, 1], [], []>} : vector<8x32xf32>, vector<32x32xf32>, vector<8x32xf32> -> vector<8x32xf32>
    %40 = vector.shape_cast %39 : vector<8x32xf32> to vector<1x8x32xf32>
    %c0_33 = arith.constant 0 : index
    %c0_34 = arith.constant 0 : index
    %c0_35 = arith.constant 0 : index
    %41 = vector.load %arg5[%c0_33, %c0_34, %c0_35] : memref<3x1x32xf32, #tpu.memory_space<vmem>>, vector<1x1x32xf32>
    %42 = vector.shape_cast %41 : vector<1x1x32xf32> to vector<1x32xf32>
    %43 = vector.shape_cast %42 : vector<1x32xf32> to vector<1x1x32xf32>
    %44 = vector.broadcast %43 : vector<1x1x32xf32> to vector<1x8x32xf32>
    %45 = arith.addf %40, %44 : vector<1x8x32xf32>
    %cst_36 = arith.constant dense<0.000000e+00> : vector<1x8xf32>
    %46 = vector.multi_reduction <add>, %45, %cst_36 [2] : vector<1x8x32xf32> to vector<1x8xf32>
    %47 = vector.shape_cast %46 : vector<1x8xf32> to vector<1x8x1xf32>
    %cst_37 = arith.constant 3.200000e+01 : f32
    %48 = vector.broadcast %cst_37 : f32 to vector<1x8x1xf32>
    %49 = arith.divf %47, %48 : vector<1x8x1xf32>
    %50 = vector.broadcast %49 : vector<1x8x1xf32> to vector<1x8x32xf32>
    %51 = arith.subf %45, %50 : vector<1x8x32xf32>
    %52 = arith.mulf %51, %51 : vector<1x8x32xf32>
    %cst_38 = arith.constant dense<0.000000e+00> : vector<1x8xf32>
    %53 = vector.multi_reduction <add>, %52, %cst_38 [2] : vector<1x8x32xf32> to vector<1x8xf32>
    %54 = vector.shape_cast %53 : vector<1x8xf32> to vector<1x8x1xf32>
    %cst_39 = arith.constant 3.200000e+01 : f32
    %55 = vector.broadcast %cst_39 : f32 to vector<1x8x1xf32>
    %56 = arith.divf %54, %55 : vector<1x8x1xf32>
    %57 = vector.broadcast %49 : vector<1x8x1xf32> to vector<1x8x32xf32>
    %58 = arith.subf %45, %57 : vector<1x8x32xf32>
    %cst_40 = arith.constant 9.99999974E-6 : f32
    %59 = vector.broadcast %cst_40 : f32 to vector<1x8x1xf32>
    %60 = arith.addf %56, %59 : vector<1x8x1xf32>
    %61 = math.rsqrt %60 : vector<1x8x1xf32>
    %62 = vector.broadcast %61 : vector<1x8x1xf32> to vector<1x8x32xf32>
    %63 = arith.mulf %58, %62 : vector<1x8x32xf32>
    %64 = vector.extract_strided_slice %9 {offsets = [0, 0, 0], sizes = [1, 1, 32], strides = [1, 1, 1]} : vector<3x1x32xf32> to vector<1x1x32xf32>
    %65 = vector.shape_cast %64 : vector<1x1x32xf32> to vector<1x32xf32>
    %66 = vector.shape_cast %65 : vector<1x32xf32> to vector<1x1x32xf32>
    %67 = vector.broadcast %66 : vector<1x1x32xf32> to vector<1x8x32xf32>
    %68 = arith.mulf %63, %67 : vector<1x8x32xf32>
    %69 = vector.extract_strided_slice %10 {offsets = [0, 0, 0], sizes = [1, 1, 32], strides = [1, 1, 1]} : vector<3x1x32xf32> to vector<1x1x32xf32>
    %70 = vector.shape_cast %69 : vector<1x1x32xf32> to vector<1x32xf32>
    %71 = vector.shape_cast %70 : vector<1x32xf32> to vector<1x1x32xf32>
    %72 = vector.broadcast %71 : vector<1x1x32xf32> to vector<1x8x32xf32>
    %73 = arith.addf %68, %72 : vector<1x8x32xf32>
    %c0_41 = arith.constant 0 : index
    %c0_42 = arith.constant 0 : index
    %c0_43 = arith.constant 0 : index
    %74 = tpu.strided_load %arg11[%c0_41, %c0_42, %c0_43] {strides = array<i32: 1, 2, 1>} : memref<1x10x32xf32, #tpu.memory_space<vmem>>, vector<1x4x32xf32>
    %75 = vector.extract_strided_slice %7 {offsets = [1, 0, 0], sizes = [1, 1, 32], strides = [1, 1, 1]} : vector<3x3x32xf32> to vector<1x1x32xf32>
    %76 = vector.shape_cast %75 : vector<1x1x32xf32> to vector<32xf32>
    %77 = vector.shape_cast %76 : vector<32xf32> to vector<1x1x32xf32>
    %78 = vector.broadcast %77 : vector<1x1x32xf32> to vector<1x4x32xf32>
    %79 = arith.mulf %74, %78 : vector<1x4x32xf32>
    %c0_44 = arith.constant 0 : index
    %c1_45 = arith.constant 1 : index
    %c0_46 = arith.constant 0 : index
    %80 = tpu.strided_load %arg11[%c0_44, %c1_45, %c0_46] {strides = array<i32: 1, 2, 1>} : memref<1x10x32xf32, #tpu.memory_space<vmem>>, vector<1x4x32xf32>
    %81 = vector.extract_strided_slice %7 {offsets = [1, 1, 0], sizes = [1, 1, 32], strides = [1, 1, 1]} : vector<3x3x32xf32> to vector<1x1x32xf32>
    %82 = vector.shape_cast %81 : vector<1x1x32xf32> to vector<32xf32>
    %83 = vector.shape_cast %82 : vector<32xf32> to vector<1x1x32xf32>
    %84 = vector.broadcast %83 : vector<1x1x32xf32> to vector<1x4x32xf32>
    %85 = arith.mulf %80, %84 : vector<1x4x32xf32>
    %86 = arith.addf %79, %85 : vector<1x4x32xf32>
    %c0_47 = arith.constant 0 : index
    %c2_48 = arith.constant 2 : index
    %c0_49 = arith.constant 0 : index
    %87 = tpu.strided_load %arg11[%c0_47, %c2_48, %c0_49] {strides = array<i32: 1, 2, 1>} : memref<1x10x32xf32, #tpu.memory_space<vmem>>, vector<1x4x32xf32>
    %88 = vector.extract_strided_slice %7 {offsets = [1, 2, 0], sizes = [1, 1, 32], strides = [1, 1, 1]} : vector<3x3x32xf32> to vector<1x1x32xf32>
    %89 = vector.shape_cast %88 : vector<1x1x32xf32> to vector<32xf32>
    %90 = vector.shape_cast %89 : vector<32xf32> to vector<1x1x32xf32>
    %91 = vector.broadcast %90 : vector<1x1x32xf32> to vector<1x4x32xf32>
    %92 = arith.mulf %87, %91 : vector<1x4x32xf32>
    %93 = arith.addf %86, %92 : vector<1x4x32xf32>
    %94 = vector.extract_strided_slice %8 {offsets = [1, 0, 0], sizes = [1, 1, 32], strides = [1, 1, 1]} : vector<3x1x32xf32> to vector<1x1x32xf32>
    %95 = vector.shape_cast %94 : vector<1x1x32xf32> to vector<1x32xf32>
    %96 = vector.shape_cast %95 : vector<1x32xf32> to vector<1x1x32xf32>
    %97 = vector.broadcast %96 : vector<1x1x32xf32> to vector<1x4x32xf32>
    %98 = arith.addf %93, %97 : vector<1x4x32xf32>
    %99 = vector.shape_cast %98 : vector<1x4x32xf32> to vector<4x32xf32>
    %c1_50 = arith.constant 1 : index
    %c0_51 = arith.constant 0 : index
    %c0_52 = arith.constant 0 : index
    %100 = vector.load %arg4[%c1_50, %c0_51, %c0_52] : memref<3x32x32xf32, #tpu.memory_space<vmem>>, vector<1x32x32xf32>
    %101 = vector.shape_cast %100 : vector<1x32x32xf32> to vector<32x32xf32>
    %cst_53 = arith.constant dense<0.000000e+00> : vector<4x32xf32>
    %102 = tpu.matmul %99, %101, %cst_53 {dimension_numbers = #tpu.dot_dimension_numbers<[1], [0], [0], [1], [0, 0, 1, 1], [], []>} : vector<4x32xf32>, vector<32x32xf32>, vector<4x32xf32> -> vector<4x32xf32>
    %103 = vector.shape_cast %102 : vector<4x32xf32> to vector<1x4x32xf32>
    %c1_54 = arith.constant 1 : index
    %c0_55 = arith.constant 0 : index
    %c0_56 = arith.constant 0 : index
    %104 = vector.load %arg5[%c1_54, %c0_55, %c0_56] : memref<3x1x32xf32, #tpu.memory_space<vmem>>, vector<1x1x32xf32>
    %105 = vector.shape_cast %104 : vector<1x1x32xf32> to vector<1x32xf32>
    %106 = vector.shape_cast %105 : vector<1x32xf32> to vector<1x1x32xf32>
    %107 = vector.broadcast %106 : vector<1x1x32xf32> to vector<1x4x32xf32>
    %108 = arith.addf %103, %107 : vector<1x4x32xf32>
    %cst_57 = arith.constant dense<0.000000e+00> : vector<1x4xf32>
    %109 = vector.multi_reduction <add>, %108, %cst_57 [2] : vector<1x4x32xf32> to vector<1x4xf32>
    %110 = vector.shape_cast %109 : vector<1x4xf32> to vector<1x4x1xf32>
    %cst_58 = arith.constant 3.200000e+01 : f32
    %111 = vector.broadcast %cst_58 : f32 to vector<1x4x1xf32>
    %112 = arith.divf %110, %111 : vector<1x4x1xf32>
    %113 = vector.broadcast %112 : vector<1x4x1xf32> to vector<1x4x32xf32>
    %114 = arith.subf %108, %113 : vector<1x4x32xf32>
    %115 = arith.mulf %114, %114 : vector<1x4x32xf32>
    %cst_59 = arith.constant dense<0.000000e+00> : vector<1x4xf32>
    %116 = vector.multi_reduction <add>, %115, %cst_59 [2] : vector<1x4x32xf32> to vector<1x4xf32>
    %117 = vector.shape_cast %116 : vector<1x4xf32> to vector<1x4x1xf32>
    %cst_60 = arith.constant 3.200000e+01 : f32
    %118 = vector.broadcast %cst_60 : f32 to vector<1x4x1xf32>
    %119 = arith.divf %117, %118 : vector<1x4x1xf32>
    %120 = vector.broadcast %112 : vector<1x4x1xf32> to vector<1x4x32xf32>
    %121 = arith.subf %108, %120 : vector<1x4x32xf32>
    %cst_61 = arith.constant 9.99999974E-6 : f32
    %122 = vector.broadcast %cst_61 : f32 to vector<1x4x1xf32>
    %123 = arith.addf %119, %122 : vector<1x4x1xf32>
    %124 = math.rsqrt %123 : vector<1x4x1xf32>
    %125 = vector.broadcast %124 : vector<1x4x1xf32> to vector<1x4x32xf32>
    %126 = arith.mulf %121, %125 : vector<1x4x32xf32>
    %127 = vector.extract_strided_slice %9 {offsets = [1, 0, 0], sizes = [1, 1, 32], strides = [1, 1, 1]} : vector<3x1x32xf32> to vector<1x1x32xf32>
    %128 = vector.shape_cast %127 : vector<1x1x32xf32> to vector<1x32xf32>
    %129 = vector.shape_cast %128 : vector<1x32xf32> to vector<1x1x32xf32>
    %130 = vector.broadcast %129 : vector<1x1x32xf32> to vector<1x4x32xf32>
    %131 = arith.mulf %126, %130 : vector<1x4x32xf32>
    %132 = vector.extract_strided_slice %10 {offsets = [1, 0, 0], sizes = [1, 1, 32], strides = [1, 1, 1]} : vector<3x1x32xf32> to vector<1x1x32xf32>
    %133 = vector.shape_cast %132 : vector<1x1x32xf32> to vector<1x32xf32>
    %134 = vector.shape_cast %133 : vector<1x32xf32> to vector<1x1x32xf32>
    %135 = vector.broadcast %134 : vector<1x1x32xf32> to vector<1x4x32xf32>
    %136 = arith.addf %131, %135 : vector<1x4x32xf32>
    %c0_62 = arith.constant 0 : index
    %c0_63 = arith.constant 0 : index
    %c0_64 = arith.constant 0 : index
    %137 = tpu.strided_load %arg11[%c0_62, %c0_63, %c0_64] {strides = array<i32: 1, 2, 1>} : memref<1x10x32xf32, #tpu.memory_space<vmem>>, vector<1x4x32xf32>
    %138 = vector.extract_strided_slice %7 {offsets = [2, 0, 0], sizes = [1, 1, 32], strides = [1, 1, 1]} : vector<3x3x32xf32> to vector<1x1x32xf32>
    %139 = vector.shape_cast %138 : vector<1x1x32xf32> to vector<32xf32>
    %140 = vector.shape_cast %139 : vector<32xf32> to vector<1x1x32xf32>
    %141 = vector.broadcast %140 : vector<1x1x32xf32> to vector<1x4x32xf32>
    %142 = arith.mulf %137, %141 : vector<1x4x32xf32>
    %c0_65 = arith.constant 0 : index
    %c1_66 = arith.constant 1 : index
    %c0_67 = arith.constant 0 : index
    %143 = tpu.strided_load %arg11[%c0_65, %c1_66, %c0_67] {strides = array<i32: 1, 2, 1>} : memref<1x10x32xf32, #tpu.memory_space<vmem>>, vector<1x4x32xf32>
    %144 = vector.extract_strided_slice %7 {offsets = [2, 1, 0], sizes = [1, 1, 32], strides = [1, 1, 1]} : vector<3x3x32xf32> to vector<1x1x32xf32>
    %145 = vector.shape_cast %144 : vector<1x1x32xf32> to vector<32xf32>
    %146 = vector.shape_cast %145 : vector<32xf32> to vector<1x1x32xf32>
    %147 = vector.broadcast %146 : vector<1x1x32xf32> to vector<1x4x32xf32>
    %148 = arith.mulf %143, %147 : vector<1x4x32xf32>
    %149 = arith.addf %142, %148 : vector<1x4x32xf32>
    %c0_68 = arith.constant 0 : index
    %c2_69 = arith.constant 2 : index
    %c0_70 = arith.constant 0 : index
    %150 = tpu.strided_load %arg11[%c0_68, %c2_69, %c0_70] {strides = array<i32: 1, 2, 1>} : memref<1x10x32xf32, #tpu.memory_space<vmem>>, vector<1x4x32xf32>
    %151 = vector.extract_strided_slice %7 {offsets = [2, 2, 0], sizes = [1, 1, 32], strides = [1, 1, 1]} : vector<3x3x32xf32> to vector<1x1x32xf32>
    %152 = vector.shape_cast %151 : vector<1x1x32xf32> to vector<32xf32>
    %153 = vector.shape_cast %152 : vector<32xf32> to vector<1x1x32xf32>
    %154 = vector.broadcast %153 : vector<1x1x32xf32> to vector<1x4x32xf32>
    %155 = arith.mulf %150, %154 : vector<1x4x32xf32>
    %156 = arith.addf %149, %155 : vector<1x4x32xf32>
    %157 = vector.extract_strided_slice %8 {offsets = [2, 0, 0], sizes = [1, 1, 32], strides = [1, 1, 1]} : vector<3x1x32xf32> to vector<1x1x32xf32>
    %158 = vector.shape_cast %157 : vector<1x1x32xf32> to vector<1x32xf32>
    %159 = vector.shape_cast %158 : vector<1x32xf32> to vector<1x1x32xf32>
    %160 = vector.broadcast %159 : vector<1x1x32xf32> to vector<1x4x32xf32>
    %161 = arith.addf %156, %160 : vector<1x4x32xf32>
    %162 = vector.shape_cast %161 : vector<1x4x32xf32> to vector<4x32xf32>
    %c2_71 = arith.constant 2 : index
    %c0_72 = arith.constant 0 : index
    %c0_73 = arith.constant 0 : index
    %163 = vector.load %arg4[%c2_71, %c0_72, %c0_73] : memref<3x32x32xf32, #tpu.memory_space<vmem>>, vector<1x32x32xf32>
    %164 = vector.shape_cast %163 : vector<1x32x32xf32> to vector<32x32xf32>
    %cst_74 = arith.constant dense<0.000000e+00> : vector<4x32xf32>
    %165 = tpu.matmul %162, %164, %cst_74 {dimension_numbers = #tpu.dot_dimension_numbers<[1], [0], [0], [1], [0, 0, 1, 1], [], []>} : vector<4x32xf32>, vector<32x32xf32>, vector<4x32xf32> -> vector<4x32xf32>
    %166 = vector.shape_cast %165 : vector<4x32xf32> to vector<1x4x32xf32>
    %c2_75 = arith.constant 2 : index
    %c0_76 = arith.constant 0 : index
    %c0_77 = arith.constant 0 : index
    %167 = vector.load %arg5[%c2_75, %c0_76, %c0_77] : memref<3x1x32xf32, #tpu.memory_space<vmem>>, vector<1x1x32xf32>
    %168 = vector.shape_cast %167 : vector<1x1x32xf32> to vector<1x32xf32>
    %169 = vector.shape_cast %168 : vector<1x32xf32> to vector<1x1x32xf32>
    %170 = vector.broadcast %169 : vector<1x1x32xf32> to vector<1x4x32xf32>
    %171 = arith.addf %166, %170 : vector<1x4x32xf32>
    %cst_78 = arith.constant dense<0.000000e+00> : vector<1x4xf32>
    %172 = vector.multi_reduction <add>, %171, %cst_78 [2] : vector<1x4x32xf32> to vector<1x4xf32>
    %173 = vector.shape_cast %172 : vector<1x4xf32> to vector<1x4x1xf32>
    %cst_79 = arith.constant 3.200000e+01 : f32
    %174 = vector.broadcast %cst_79 : f32 to vector<1x4x1xf32>
    %175 = arith.divf %173, %174 : vector<1x4x1xf32>
    %176 = vector.broadcast %175 : vector<1x4x1xf32> to vector<1x4x32xf32>
    %177 = arith.subf %171, %176 : vector<1x4x32xf32>
    %178 = arith.mulf %177, %177 : vector<1x4x32xf32>
    %cst_80 = arith.constant dense<0.000000e+00> : vector<1x4xf32>
    %179 = vector.multi_reduction <add>, %178, %cst_80 [2] : vector<1x4x32xf32> to vector<1x4xf32>
    %180 = vector.shape_cast %179 : vector<1x4xf32> to vector<1x4x1xf32>
    %cst_81 = arith.constant 3.200000e+01 : f32
    %181 = vector.broadcast %cst_81 : f32 to vector<1x4x1xf32>
    %182 = arith.divf %180, %181 : vector<1x4x1xf32>
    %183 = vector.broadcast %175 : vector<1x4x1xf32> to vector<1x4x32xf32>
    %184 = arith.subf %171, %183 : vector<1x4x32xf32>
    %cst_82 = arith.constant 9.99999974E-6 : f32
    %185 = vector.broadcast %cst_82 : f32 to vector<1x4x1xf32>
    %186 = arith.addf %182, %185 : vector<1x4x1xf32>
    %187 = math.rsqrt %186 : vector<1x4x1xf32>
    %188 = vector.broadcast %187 : vector<1x4x1xf32> to vector<1x4x32xf32>
    %189 = arith.mulf %184, %188 : vector<1x4x32xf32>
    %190 = vector.extract_strided_slice %9 {offsets = [2, 0, 0], sizes = [1, 1, 32], strides = [1, 1, 1]} : vector<3x1x32xf32> to vector<1x1x32xf32>
    %191 = vector.shape_cast %190 : vector<1x1x32xf32> to vector<1x32xf32>
    %192 = vector.shape_cast %191 : vector<1x32xf32> to vector<1x1x32xf32>
    %193 = vector.broadcast %192 : vector<1x1x32xf32> to vector<1x4x32xf32>
    %194 = arith.mulf %189, %193 : vector<1x4x32xf32>
    %195 = vector.extract_strided_slice %10 {offsets = [2, 0, 0], sizes = [1, 1, 32], strides = [1, 1, 1]} : vector<3x1x32xf32> to vector<1x1x32xf32>
    %196 = vector.shape_cast %195 : vector<1x1x32xf32> to vector<1x32xf32>
    %197 = vector.shape_cast %196 : vector<1x32xf32> to vector<1x1x32xf32>
    %198 = vector.broadcast %197 : vector<1x1x32xf32> to vector<1x4x32xf32>
    %199 = arith.addf %194, %198 : vector<1x4x32xf32>
    %200 = tpu.concatenate %1, %73 in 1 : vector<1x1x32xf32>, vector<1x8x32xf32> -> vector<1x9x32xf32>
    %cst_83 = arith.constant 0.000000e+00 : f32
    %201 = vector.broadcast %cst_83 : f32 to vector<1x123x32xf32>
    %202 = tpu.concatenate %1, %136, %201 in 1 : vector<1x1x32xf32>, vector<1x4x32xf32>, vector<1x123x32xf32> -> vector<1x128x32xf32>
    %203 = tpu.concatenate %1, %199, %201 in 1 : vector<1x1x32xf32>, vector<1x4x32xf32>, vector<1x123x32xf32> -> vector<1x128x32xf32>
    %204 = tpu.iota {dimensions = array<i32: 2>} : vector<1x9x128xi32>
    %c5_i32 = arith.constant 5 : i32
    %205 = vector.broadcast %c5_i32 : i32 to vector<1x9x128xi32>
    %206 = arith.cmpi slt, %204, %205 : vector<1x9x128xi32>
    %207 = vector.extract_strided_slice %200 {offsets = [0, 0, 0], sizes = [1, 9, 8], strides = [1, 1, 1]} : vector<1x9x32xf32> to vector<1x9x8xf32>
    %208 = vector.extract_strided_slice %202 {offsets = [0, 0, 0], sizes = [1, 128, 8], strides = [1, 1, 1]} : vector<1x128x32xf32> to vector<1x128x8xf32>
    %209 = vector.extract_strided_slice %203 {offsets = [0, 0, 0], sizes = [1, 128, 8], strides = [1, 1, 1]} : vector<1x128x32xf32> to vector<1x128x8xf32>
    "tpu.trace_start"() <{level = 10 : i32, message = "bqd,bkd->bqk"}> : () -> ()
    %cst_84 = arith.constant dense<0.000000e+00> : vector<1x9x128xf32>
    %210 = tpu.matmul %207, %208, %cst_84 {dimension_numbers = #tpu.dot_dimension_numbers<[2], [2], [1], [1], [0, 0, 0, 1, 1, 1], [0], [0]>} : vector<1x9x8xf32>, vector<1x128x8xf32>, vector<1x9x128xf32> -> vector<1x9x128xf32>
    "tpu.trace_stop"() : () -> ()
    %cst_85 = arith.constant 0.353553385 : f32
    %211 = vector.broadcast %cst_85 : f32 to vector<1x9x128xf32>
    %212 = arith.mulf %210, %211 : vector<1x9x128xf32>
    %cst_86 = arith.constant -1.000000e+30 : f32
    %213 = vector.broadcast %cst_86 : f32 to vector<1x9x128xf32>
    %214 = arith.select %206, %212, %213 : vector<1x9x128xi1>, vector<1x9x128xf32>
    %cst_87 = arith.constant dense<0xFF800000> : vector<1x9xf32>
    %215 = vector.multi_reduction <maximumf>, %214, %cst_87 [2] : vector<1x9x128xf32> to vector<1x9xf32>
    %216 = vector.shape_cast %215 : vector<1x9xf32> to vector<1x9x1xf32>
    %217 = vector.broadcast %216 : vector<1x9x1xf32> to vector<1x9x128xf32>
    %218 = arith.subf %214, %217 : vector<1x9x128xf32>
    %219 = math.exp %218 : vector<1x9x128xf32>
    %cst_88 = arith.constant dense<0.000000e+00> : vector<1x9xf32>
    %220 = vector.multi_reduction <add>, %219, %cst_88 [2] : vector<1x9x128xf32> to vector<1x9xf32>
    %221 = vector.shape_cast %220 : vector<1x9xf32> to vector<1x9x1xf32>
    %222 = vector.broadcast %221 : vector<1x9x1xf32> to vector<1x9x128xf32>
    %223 = arith.divf %219, %222 : vector<1x9x128xf32>
    %c0_89 = arith.constant 0 : index
    %c0_90 = arith.constant 0 : index
    %c0_91 = arith.constant 0 : index
    %c0_92 = arith.constant 0 : index
    %224 = vector.load %arg10[%c0_89, %c0_90, %c0_91, %c0_92] : memref<4x1x9x128xf32, #tpu.memory_space<vmem>>, vector<1x1x9x128xf32>
    %225 = vector.shape_cast %224 : vector<1x1x9x128xf32> to vector<1x9x128xf32>
    %226 = vector.shape_cast %223 : vector<1x9x128xf32> to vector<1x1x9x128xf32>
    tpu.vector_store %arg10[%c0_89, %c0_90, %c0_91, %c0_92], %226 {strides = array<i32>} : memref<4x1x9x128xf32, #tpu.memory_space<vmem>>, vector<1x1x9x128xf32>,
    "tpu.trace_start"() <{level = 10 : i32, message = "bqk,bkd->bqd"}> : () -> ()
    %cst_93 = arith.constant dense<0.000000e+00> : vector<1x9x8xf32>
    %227 = tpu.matmul %223, %209, %cst_93 {dimension_numbers = #tpu.dot_dimension_numbers<[2], [1], [1], [2], [0, 0, 0, 1, 1, 2], [0], [0]>} : vector<1x9x128xf32>, vector<1x128x8xf32>, vector<1x9x8xf32> -> vector<1x9x8xf32>
    "tpu.trace_stop"() : () -> ()
    %c0_94 = arith.constant 0 : index
    %c0_95 = arith.constant 0 : index
    %c0_96 = arith.constant 0 : index
    %228 = vector.load %arg12[%c0_94, %c0_95, %c0_96] : memref<1x9x32xf32, #tpu.memory_space<vmem>>, vector<1x9x8xf32>
    tpu.vector_store %arg12[%c0_94, %c0_95, %c0_96], %227 {strides = array<i32>} : memref<1x9x32xf32, #tpu.memory_space<vmem>>, vector<1x9x8xf32>,
    %229 = vector.extract_strided_slice %200 {offsets = [0, 0, 8], sizes = [1, 9, 8], strides = [1, 1, 1]} : vector<1x9x32xf32> to vector<1x9x8xf32>
    %230 = vector.extract_strided_slice %202 {offsets = [0, 0, 8], sizes = [1, 128, 8], strides = [1, 1, 1]} : vector<1x128x32xf32> to vector<1x128x8xf32>
    %231 = vector.extract_strided_slice %203 {offsets = [0, 0, 8], sizes = [1, 128, 8], strides = [1, 1, 1]} : vector<1x128x32xf32> to vector<1x128x8xf32>
    "tpu.trace_start"() <{level = 10 : i32, message = "bqd,bkd->bqk"}> : () -> ()
    %cst_97 = arith.constant dense<0.000000e+00> : vector<1x9x128xf32>
    %232 = tpu.matmul %229, %230, %cst_97 {dimension_numbers = #tpu.dot_dimension_numbers<[2], [2], [1], [1], [0, 0, 0, 1, 1, 1], [0], [0]>} : vector<1x9x8xf32>, vector<1x128x8xf32>, vector<1x9x128xf32> -> vector<1x9x128xf32>
    "tpu.trace_stop"() : () -> ()
    %cst_98 = arith.constant 0.353553385 : f32
    %233 = vector.broadcast %cst_98 : f32 to vector<1x9x128xf32>
    %234 = arith.mulf %232, %233 : vector<1x9x128xf32>
    %cst_99 = arith.constant -1.000000e+30 : f32
    %235 = vector.broadcast %cst_99 : f32 to vector<1x9x128xf32>
    %236 = arith.select %206, %234, %235 : vector<1x9x128xi1>, vector<1x9x128xf32>
    %cst_100 = arith.constant dense<0xFF800000> : vector<1x9xf32>
    %237 = vector.multi_reduction <maximumf>, %236, %cst_100 [2] : vector<1x9x128xf32> to vector<1x9xf32>
    %238 = vector.shape_cast %237 : vector<1x9xf32> to vector<1x9x1xf32>
    %239 = vector.broadcast %238 : vector<1x9x1xf32> to vector<1x9x128xf32>
    %240 = arith.subf %236, %239 : vector<1x9x128xf32>
    %241 = math.exp %240 : vector<1x9x128xf32>
    %cst_101 = arith.constant dense<0.000000e+00> : vector<1x9xf32>
    %242 = vector.multi_reduction <add>, %241, %cst_101 [2] : vector<1x9x128xf32> to vector<1x9xf32>
    %243 = vector.shape_cast %242 : vector<1x9xf32> to vector<1x9x1xf32>
    %244 = vector.broadcast %243 : vector<1x9x1xf32> to vector<1x9x128xf32>
    %245 = arith.divf %241, %244 : vector<1x9x128xf32>
    %c1_102 = arith.constant 1 : index
    %c0_103 = arith.constant 0 : index
    %c0_104 = arith.constant 0 : index
    %c0_105 = arith.constant 0 : index
    %246 = vector.load %arg10[%c1_102, %c0_103, %c0_104, %c0_105] : memref<4x1x9x128xf32, #tpu.memory_space<vmem>>, vector<1x1x9x128xf32>
    %247 = vector.shape_cast %246 : vector<1x1x9x128xf32> to vector<1x9x128xf32>
    %248 = vector.shape_cast %245 : vector<1x9x128xf32> to vector<1x1x9x128xf32>
    tpu.vector_store %arg10[%c1_102, %c0_103, %c0_104, %c0_105], %248 {strides = array<i32>} : memref<4x1x9x128xf32, #tpu.memory_space<vmem>>, vector<1x1x9x128xf32>,
    "tpu.trace_start"() <{level = 10 : i32, message = "bqk,bkd->bqd"}> : () -> ()
    %cst_106 = arith.constant dense<0.000000e+00> : vector<1x9x8xf32>
    %249 = tpu.matmul %245, %231, %cst_106 {dimension_numbers = #tpu.dot_dimension_numbers<[2], [1], [1], [2], [0, 0, 0, 1, 1, 2], [0], [0]>} : vector<1x9x128xf32>, vector<1x128x8xf32>, vector<1x9x8xf32> -> vector<1x9x8xf32>
    "tpu.trace_stop"() : () -> ()
    %c0_107 = arith.constant 0 : index
    %c0_108 = arith.constant 0 : index
    %c8 = arith.constant 8 : index
    %250 = vector.load %arg12[%c0_107, %c0_108, %c8] : memref<1x9x32xf32, #tpu.memory_space<vmem>>, vector<1x9x8xf32>
    tpu.vector_store %arg12[%c0_107, %c0_108, %c8], %249 {strides = array<i32>} : memref<1x9x32xf32, #tpu.memory_space<vmem>>, vector<1x9x8xf32>,
    %251 = vector.extract_strided_slice %200 {offsets = [0, 0, 16], sizes = [1, 9, 8], strides = [1, 1, 1]} : vector<1x9x32xf32> to vector<1x9x8xf32>
    %252 = vector.extract_strided_slice %202 {offsets = [0, 0, 16], sizes = [1, 128, 8], strides = [1, 1, 1]} : vector<1x128x32xf32> to vector<1x128x8xf32>
    %253 = vector.extract_strided_slice %203 {offsets = [0, 0, 16], sizes = [1, 128, 8], strides = [1, 1, 1]} : vector<1x128x32xf32> to vector<1x128x8xf32>
    "tpu.trace_start"() <{level = 10 : i32, message = "bqd,bkd->bqk"}> : () -> ()
    %cst_109 = arith.constant dense<0.000000e+00> : vector<1x9x128xf32>
    %254 = tpu.matmul %251, %252, %cst_109 {dimension_numbers = #tpu.dot_dimension_numbers<[2], [2], [1], [1], [0, 0, 0, 1, 1, 1], [0], [0]>} : vector<1x9x8xf32>, vector<1x128x8xf32>, vector<1x9x128xf32> -> vector<1x9x128xf32>
    "tpu.trace_stop"() : () -> ()
    %cst_110 = arith.constant 0.353553385 : f32
    %255 = vector.broadcast %cst_110 : f32 to vector<1x9x128xf32>
    %256 = arith.mulf %254, %255 : vector<1x9x128xf32>
    %cst_111 = arith.constant -1.000000e+30 : f32
    %257 = vector.broadcast %cst_111 : f32 to vector<1x9x128xf32>
    %258 = arith.select %206, %256, %257 : vector<1x9x128xi1>, vector<1x9x128xf32>
    %cst_112 = arith.constant dense<0xFF800000> : vector<1x9xf32>
    %259 = vector.multi_reduction <maximumf>, %258, %cst_112 [2] : vector<1x9x128xf32> to vector<1x9xf32>
    %260 = vector.shape_cast %259 : vector<1x9xf32> to vector<1x9x1xf32>
    %261 = vector.broadcast %260 : vector<1x9x1xf32> to vector<1x9x128xf32>
    %262 = arith.subf %258, %261 : vector<1x9x128xf32>
    %263 = math.exp %262 : vector<1x9x128xf32>
    %cst_113 = arith.constant dense<0.000000e+00> : vector<1x9xf32>
    %264 = vector.multi_reduction <add>, %263, %cst_113 [2] : vector<1x9x128xf32> to vector<1x9xf32>
    %265 = vector.shape_cast %264 : vector<1x9xf32> to vector<1x9x1xf32>
    %266 = vector.broadcast %265 : vector<1x9x1xf32> to vector<1x9x128xf32>
    %267 = arith.divf %263, %266 : vector<1x9x128xf32>
    %c2_114 = arith.constant 2 : index
    %c0_115 = arith.constant 0 : index
    %c0_116 = arith.constant 0 : index
    %c0_117 = arith.constant 0 : index
    %268 = vector.load %arg10[%c2_114, %c0_115, %c0_116, %c0_117] : memref<4x1x9x128xf32, #tpu.memory_space<vmem>>, vector<1x1x9x128xf32>
    %269 = vector.shape_cast %268 : vector<1x1x9x128xf32> to vector<1x9x128xf32>
    %270 = vector.shape_cast %267 : vector<1x9x128xf32> to vector<1x1x9x128xf32>
    tpu.vector_store %arg10[%c2_114, %c0_115, %c0_116, %c0_117], %270 {strides = array<i32>} : memref<4x1x9x128xf32, #tpu.memory_space<vmem>>, vector<1x1x9x128xf32>,
    "tpu.trace_start"() <{level = 10 : i32, message = "bqk,bkd->bqd"}> : () -> ()
    %cst_118 = arith.constant dense<0.000000e+00> : vector<1x9x8xf32>
    %271 = tpu.matmul %267, %253, %cst_118 {dimension_numbers = #tpu.dot_dimension_numbers<[2], [1], [1], [2], [0, 0, 0, 1, 1, 2], [0], [0]>} : vector<1x9x128xf32>, vector<1x128x8xf32>, vector<1x9x8xf32> -> vector<1x9x8xf32>
    "tpu.trace_stop"() : () -> ()
    %c0_119 = arith.constant 0 : index
    %c0_120 = arith.constant 0 : index
    %c16 = arith.constant 16 : index
    %272 = vector.load %arg12[%c0_119, %c0_120, %c16] : memref<1x9x32xf32, #tpu.memory_space<vmem>>, vector<1x9x8xf32>
    tpu.vector_store %arg12[%c0_119, %c0_120, %c16], %271 {strides = array<i32>} : memref<1x9x32xf32, #tpu.memory_space<vmem>>, vector<1x9x8xf32>,
    %273 = vector.extract_strided_slice %200 {offsets = [0, 0, 24], sizes = [1, 9, 8], strides = [1, 1, 1]} : vector<1x9x32xf32> to vector<1x9x8xf32>
    %274 = vector.extract_strided_slice %202 {offsets = [0, 0, 24], sizes = [1, 128, 8], strides = [1, 1, 1]} : vector<1x128x32xf32> to vector<1x128x8xf32>
    %275 = vector.extract_strided_slice %203 {offsets = [0, 0, 24], sizes = [1, 128, 8], strides = [1, 1, 1]} : vector<1x128x32xf32> to vector<1x128x8xf32>
    "tpu.trace_start"() <{level = 10 : i32, message = "bqd,bkd->bqk"}> : () -> ()
    %cst_121 = arith.constant dense<0.000000e+00> : vector<1x9x128xf32>
    %276 = tpu.matmul %273, %274, %cst_121 {dimension_numbers = #tpu.dot_dimension_numbers<[2], [2], [1], [1], [0, 0, 0, 1, 1, 1], [0], [0]>} : vector<1x9x8xf32>, vector<1x128x8xf32>, vector<1x9x128xf32> -> vector<1x9x128xf32>
    "tpu.trace_stop"() : () -> ()
    %cst_122 = arith.constant 0.353553385 : f32
    %277 = vector.broadcast %cst_122 : f32 to vector<1x9x128xf32>
    %278 = arith.mulf %276, %277 : vector<1x9x128xf32>
    %cst_123 = arith.constant -1.000000e+30 : f32
    %279 = vector.broadcast %cst_123 : f32 to vector<1x9x128xf32>
    %280 = arith.select %206, %278, %279 : vector<1x9x128xi1>, vector<1x9x128xf32>
    %cst_124 = arith.constant dense<0xFF800000> : vector<1x9xf32>
    %281 = vector.multi_reduction <maximumf>, %280, %cst_124 [2] : vector<1x9x128xf32> to vector<1x9xf32>
    %282 = vector.shape_cast %281 : vector<1x9xf32> to vector<1x9x1xf32>
    %283 = vector.broadcast %282 : vector<1x9x1xf32> to vector<1x9x128xf32>
    %284 = arith.subf %280, %283 : vector<1x9x128xf32>
    %285 = math.exp %284 : vector<1x9x128xf32>
    %cst_125 = arith.constant dense<0.000000e+00> : vector<1x9xf32>
    %286 = vector.multi_reduction <add>, %285, %cst_125 [2] : vector<1x9x128xf32> to vector<1x9xf32>
    %287 = vector.shape_cast %286 : vector<1x9xf32> to vector<1x9x1xf32>
    %288 = vector.broadcast %287 : vector<1x9x1xf32> to vector<1x9x128xf32>
    %289 = arith.divf %285, %288 : vector<1x9x128xf32>
    %c3 = arith.constant 3 : index
    %c0_126 = arith.constant 0 : index
    %c0_127 = arith.constant 0 : index
    %c0_128 = arith.constant 0 : index
    %290 = vector.load %arg10[%c3, %c0_126, %c0_127, %c0_128] : memref<4x1x9x128xf32, #tpu.memory_space<vmem>>, vector<1x1x9x128xf32>
    %291 = vector.shape_cast %290 : vector<1x1x9x128xf32> to vector<1x9x128xf32>
    %292 = vector.shape_cast %289 : vector<1x9x128xf32> to vector<1x1x9x128xf32>
    tpu.vector_store %arg10[%c3, %c0_126, %c0_127, %c0_128], %292 {strides = array<i32>} : memref<4x1x9x128xf32, #tpu.memory_space<vmem>>, vector<1x1x9x128xf32>,
    "tpu.trace_start"() <{level = 10 : i32, message = "bqk,bkd->bqd"}> : () -> ()
    %cst_129 = arith.constant dense<0.000000e+00> : vector<1x9x8xf32>
    %293 = tpu.matmul %289, %275, %cst_129 {dimension_numbers = #tpu.dot_dimension_numbers<[2], [1], [1], [2], [0, 0, 0, 1, 1, 2], [0], [0]>} : vector<1x9x128xf32>, vector<1x128x8xf32>, vector<1x9x8xf32> -> vector<1x9x8xf32>
    "tpu.trace_stop"() : () -> ()
    %c0_130 = arith.constant 0 : index
    %c0_131 = arith.constant 0 : index
    %c24 = arith.constant 24 : index
    %294 = vector.load %arg12[%c0_130, %c0_131, %c24] : memref<1x9x32xf32, #tpu.memory_space<vmem>>, vector<1x9x8xf32>
    tpu.vector_store %arg12[%c0_130, %c0_131, %c24], %293 {strides = array<i32>} : memref<1x9x32xf32, #tpu.memory_space<vmem>>, vector<1x9x8xf32>,
    %c0_132 = arith.constant 0 : index
    %c0_133 = arith.constant 0 : index
    %c0_134 = arith.constant 0 : index
    %295 = vector.load %arg12[%c0_132, %c0_133, %c0_134] : memref<1x9x32xf32, #tpu.memory_space<vmem>>, vector<1x9x32xf32>
    %296 = vector.shape_cast %295 : vector<1x9x32xf32> to vector<9x32xf32>
    %c0_135 = arith.constant 0 : index
    %c0_136 = arith.constant 0 : index
    %297 = vector.load %arg8[%c0_135, %c0_136] : memref<32x32xf32, #tpu.memory_space<vmem>>, vector<32x32xf32>
    %cst_137 = arith.constant dense<0.000000e+00> : vector<9x32xf32>
    %298 = tpu.matmul %296, %297, %cst_137 {dimension_numbers = #tpu.dot_dimension_numbers<[1], [0], [0], [1], [0, 0, 1, 1], [], []>} : vector<9x32xf32>, vector<32x32xf32>, vector<9x32xf32> -> vector<9x32xf32>
    %299 = vector.shape_cast %298 : vector<9x32xf32> to vector<1x9x32xf32>
    %c0_138 = arith.constant 0 : index
    %c0_139 = arith.constant 0 : index
    %c0_140 = arith.constant 0 : index
    %300 = vector.load %arg9[%c0_138, %c0_139, %c0_140] : memref<1x9x32xf32, #tpu.memory_space<vmem>>, vector<1x9x32xf32>
    tpu.vector_store %arg9[%c0_138, %c0_139, %c0_140], %299 {strides = array<i32>} : memref<1x9x32xf32, #tpu.memory_space<vmem>>, vector<1x9x32xf32>,
    return
  }
  func.func @transform_0(%arg0: i32) -> (i32, i32, i32) {
    %c0_i32 = arith.constant 0 : i32
    %c0_i32_0 = arith.constant 0 : i32
    %c0_i32_1 = arith.constant 0 : i32
    return %arg0, %c0_i32, %c0_i32_0 : i32, i32, i32
  }
  func.func @transform_1(%arg0: i32) -> (i32, i32, i32) {
    %c0_i32 = arith.constant 0 : i32
    %c0_i32_0 = arith.constant 0 : i32
    %c0_i32_1 = arith.constant 0 : i32
    %c0_i32_2 = arith.constant 0 : i32
    return %c0_i32, %c0_i32_0, %c0_i32_1 : i32, i32, i32
  }
  func.func @transform_2(%arg0: i32) -> (i32, i32, i32) {
    %c0_i32 = arith.constant 0 : i32
    %c0_i32_0 = arith.constant 0 : i32
    %c0_i32_1 = arith.constant 0 : i32
    %c0_i32_2 = arith.constant 0 : i32
    return %c0_i32, %c0_i32_0, %c0_i32_1 : i32, i32, i32
  }
  func.func @transform_3(%arg0: i32) -> (i32, i32, i32) {
    %c0_i32 = arith.constant 0 : i32
    %c0_i32_0 = arith.constant 0 : i32
    %c0_i32_1 = arith.constant 0 : i32
    %c0_i32_2 = arith.constant 0 : i32
    return %c0_i32, %c0_i32_0, %c0_i32_1 : i32, i32, i32
  }
  func.func @transform_4(%arg0: i32) -> (i32, i32, i32) {
    %c0_i32 = arith.constant 0 : i32
    %c0_i32_0 = arith.constant 0 : i32
    %c0_i32_1 = arith.constant 0 : i32
    %c0_i32_2 = arith.constant 0 : i32
    return %c0_i32, %c0_i32_0, %c0_i32_1 : i32, i32, i32
  }
  func.func @transform_5(%arg0: i32) -> (i32, i32, i32) {
    %c0_i32 = arith.constant 0 : i32
    %c0_i32_0 = arith.constant 0 : i32
    %c0_i32_1 = arith.constant 0 : i32
    %c0_i32_2 = arith.constant 0 : i32
    return %c0_i32, %c0_i32_0, %c0_i32_1 : i32, i32, i32
  }
  func.func @transform_6(%arg0: i32) -> (i32, i32, i32) {
    %c0_i32 = arith.constant 0 : i32
    %c0_i32_0 = arith.constant 0 : i32
    %c0_i32_1 = arith.constant 0 : i32
    %c0_i32_2 = arith.constant 0 : i32
    return %c0_i32, %c0_i32_0, %c0_i32_1 : i32, i32, i32
  }
  func.func @transform_7(%arg0: i32) -> (i32, i32) {
    %c0_i32 = arith.constant 0 : i32
    %c0_i32_0 = arith.constant 0 : i32
    %c0_i32_1 = arith.constant 0 : i32
    return %c0_i32, %c0_i32_0 : i32, i32
  }
  func.func @transform_8(%arg0: i32) -> (i32, i32, i32) {
    %c0_i32 = arith.constant 0 : i32
    %c0_i32_0 = arith.constant 0 : i32
    %c0_i32_1 = arith.constant 0 : i32
    return %arg0, %c0_i32, %c0_i32_0 : i32, i32, i32
  }
  func.func @transform_9(%arg0: i32) -> (i32, i32, i32, i32) {
    %c0_i32 = arith.constant 0 : i32
    %c0_i32_0 = arith.constant 0 : i32
    %c0_i32_1 = arith.constant 0 : i32
    %c0_i32_2 = arith.constant 0 : i32
    return %c0_i32, %arg0, %c0_i32_0, %c0_i32_1 : i32, i32, i32, i32
  }
}

</mosaic_0001>

<llo_original>
// kernel: tpu_custom_call.1
$region0: #{tpu_custom_call.1}
  #allocation0 [shape = 'u32[]', space=smem, size = 0x4, offset = 0x4, fixed_abs, tag = 'smem constant byte address 0x4 - core index']
  #allocation1 [shape = 'u32[144,128]{1,0:T(1,128)}', space=vmem, size = 0x12000, scoped, tag = 'internal scratch']
  #allocation2 [shape = 'f32[1,10,32]{2,1,0:T(8,128)}', space=vmem, size = 0x2000, scoped, tag = 'scratch operand']
  #allocation3 [shape = 'f32[1,9,32]{2,1,0:T(8,128)}', space=vmem, size = 0x2000, scoped, tag = 'scratch operand']
  %s0 = inlined_call_operand.vmem [shape: f32[2,9,32], index: 0, kind: input, shape index: {}]
  %s1 = inlined_call_operand.vmem [shape: f32[3,3,32], index: 1, kind: input, shape index: {}]
  %s2 = inlined_call_operand.vmem [shape: f32[3,1,32], index: 2, kind: input, shape index: {}]
  %s3 = inlined_call_operand.hbm [shape: f32[3,32,32], index: 3, kind: input, shape index: {}]
  %s4 = inlined_call_operand.vmem [shape: f32[3,1,32], index: 4, kind: input, shape index: {}]
  %s5 = inlined_call_operand.vmem [shape: f32[3,1,32], index: 5, kind: input, shape index: {}]
  %s6 = inlined_call_operand.vmem [shape: f32[3,1,32], index: 6, kind: input, shape index: {}]
  %s7 = inlined_call_operand.vmem [shape: f32[32,32], index: 7, kind: input, shape index: {}]
  %s8 = inlined_call_operand.vmem [shape: f32[2,9,32], index: 8, kind: output, shape index: {0}]
  %s9 = inlined_call_operand.vmem [shape: f32[4,2,9,128], index: 9, kind: output, shape index: {1}]
  %10 = xla_tuple %s8, %s9
  %s11 = sld [smem:[#allocation0]]
  $region111: #{tpu_custom_call.1} parent=0
    _
  %s13 = ssub.s32 1, %s11
  %s14 = scalar_select 0, %s13, %s11
  $region1: #{tpu_custom_call.1} parent=0
    #allocation4 [shape = 'u8[49152]{0}', space=vmem, size = 0xc000, scoped, tag = 'input window, operand 3, single buffered']
    #allocation5 [shape = 's32[2]{0}', space=sflag, size = 0x8, scoped, tag = 'scoped memory for tpu_custom_call.1']
    #allocation6 [shape = 'u8[65536]{0}', space=vmem, size = 0x10000, scoped, tag = 'output window, operand 1']
    %15 = vsyncpa [#allocation5], 0
    loop: start=0, step=1, limit=4
    $region2: #{tpu_custom_call.1} parent=1 // loop_pre_header
      _
    $region3: #{tpu_custom_call.1} parent=1 // loop_header
      %s17 = sphi 0, %s21
      %p18 = scmp.ge.s32.totalorder %s17, 4
      %s27 = sphi 0, %s29
      %s30 = sphi 0, %s27
      %s31 = sphi 0, %s30
      %s47 = sphi 0, %s31
      %s51 = sphi 0, %s51
      %s53 = sphi 0, %s51
      %s54 = sphi 0, %s53
      %s68 = sphi 0, %s54
      %s72 = sphi 0, %s72
      %s74 = sphi 0, %s72
      %s75 = sphi 0, %s74
      %s89 = sphi 0, %s75
      %s93 = sphi 0, %s93
      %s95 = sphi 0, %s93
      %s96 = sphi 0, %s95
      %s110 = sphi 0, %s96
      %s114 = sphi 0, %s114
      %s116 = sphi 0, %s114
      %s117 = sphi 0, %s116
      %s131 = sphi 0, %s117
      %s135 = sphi 0, %s135
      %s137 = sphi 0, %s135
      %s138 = sphi 0, %s137
      %s152 = sphi 0, %s138
      %s156 = sphi 0, %s156
      %s158 = sphi 0, %s156
      %s159 = sphi 0, %s158
      %s173 = sphi 0, %s159
      %s177 = sphi 0, %s177
      %s179 = sphi 0, %s177
      %s180 = sphi 0, %s179
      %s194 = sphi 0, %s180
      %s200 = sphi 0, %s202
      %s203 = sphi 0, %s200
      %s204 = sphi 0, %s203
      %s220 = sphi 0, %s204
      %s226 = sphi 0, %s228
      %s229 = sphi 0, %s226
      %s230 = sphi 0, %s229
      %s246 = sphi 0, %s230
    $region4: #{tpu_custom_call.1} parent=1 // loop_header_branch
      %20 = sbr.rel (%p18) target = $region8
    $region5: #{tpu_custom_call.1} parent=1 // loop_body
      %s22 = ssub.s32 %s17, 1
      %s23 = ssub.s32 %s17, 2
      %s24 = sadd.s32 %s17, 1
      %s25 = ssub.s32 %s17, %s24
      %p26 = scmp.eq.s32.totalorder %s25, 0
      %s28 = sadd.s32 %s27, 1
      %s29 = scalar_select %p26, %s27, %s28
      %p32 = pneg %p26
      %p33 = scmp.eq.s32.totalorder %s17, 1
      %p34 = por %p32, %p33
      %p35 = scmp.ne.s32.totalorder %s27, %s30
      %p36 = scmp.eq.s32.totalorder %s17, 0
      %p37 = por %p35, %p36
      %p38 = scmp.ne.s32.totalorder %s27, %s30
      %p39 = scmp.eq.s32.totalorder %s22, 1
      %p40 = por %p38, %p39
      %p41 = scmp.ne.s32.totalorder %s30, %s31
      %p42 = scmp.eq.s32.totalorder %s22, 0
      %p43 = por %p41, %p42
      %p44 = scmp.ne.s32.totalorder %s30, %s31
      %p45 = scmp.eq.s32.totalorder %s23, 1
      %p46 = por %p44, %p45
      %p48 = scmp.ne.s32.totalorder %s31, %s47
      %p49 = scmp.eq.s32.totalorder %s23, 0
      %p50 = por %p48, %p49
      %s52 = sadd.s32 %s51, 1
      %p55 = scmp.eq.s32.totalorder %s17, 1
      %p56 = scmp.ne.s32.totalorder %s51, %s53
      %p57 = scmp.eq.s32.totalorder %s17, 0
      %p58 = por %p56, %p57
      %p59 = scmp.ne.s32.totalorder %s51, %s53
      %p60 = scmp.eq.s32.totalorder %s22, 1
      %p61 = por %p59, %p60
      %p62 = scmp.ne.s32.totalorder %s53, %s54
      %p63 = scmp.eq.s32.totalorder %s22, 0
      %p64 = por %p62, %p63
      %p65 = scmp.ne.s32.totalorder %s53, %s54
      %p66 = scmp.eq.s32.totalorder %s23, 1
      %p67 = por %p65, %p66
      %p69 = scmp.ne.s32.totalorder %s54, %s68
      %p70 = scmp.eq.s32.totalorder %s23, 0
      %p71 = por %p69, %p70
      %s73 = sadd.s32 %s72, 1
      %p76 = scmp.eq.s32.totalorder %s17, 1
      %p77 = scmp.ne.s32.totalorder %s72, %s74
      %p78 = scmp.eq.s32.totalorder %s17, 0
      %p79 = por %p77, %p78
      %p80 = scmp.ne.s32.totalorder %s72, %s74
      %p81 = scmp.eq.s32.totalorder %s22, 1
      %p82 = por %p80, %p81
      %p83 = scmp.ne.s32.totalorder %s74, %s75
      %p84 = scmp.eq.s32.totalorder %s22, 0
      %p85 = por %p83, %p84
      %p86 = scmp.ne.s32.totalorder %s74, %s75
      %p87 = scmp.eq.s32.totalorder %s23, 1
      %p88 = por %p86, %p87
      %p90 = scmp.ne.s32.totalorder %s75, %s89
      %p91 = scmp.eq.s32.totalorder %s23, 0
      %p92 = por %p90, %p91
      %s94 = sadd.s32 %s93, 1
      %p97 = scmp.eq.s32.totalorder %s17, 1
      %p98 = scmp.ne.s32.totalorder %s93, %s95
      %p99 = scmp.eq.s32.totalorder %s17, 0
      %p100 = por %p98, %p99
      %p101 = scmp.ne.s32.totalorder %s93, %s95
      %p102 = scmp.eq.s32.totalorder %s22, 1
      %p103 = por %p101, %p102
      %p104 = scmp.ne.s32.totalorder %s95, %s96
      %p105 = scmp.eq.s32.totalorder %s22, 0
      %p106 = por %p104, %p105
      %p107 = scmp.ne.s32.totalorder %s95, %s96
      %p108 = scmp.eq.s32.totalorder %s23, 1
      %p109 = por %p107, %p108
      %p111 = scmp.ne.s32.totalorder %s96, %s110
      %p112 = scmp.eq.s32.totalorder %s23, 0
      %p113 = por %p111, %p112
      %s115 = sadd.s32 %s114, 1
      %p118 = scmp.eq.s32.totalorder %s17, 1
      %p119 = scmp.ne.s32.totalorder %s114, %s116
      %p120 = scmp.eq.s32.totalorder %s17, 0
      %p121 = por %p119, %p120
      %p122 = scmp.ne.s32.totalorder %s114, %s116
      %p123 = scmp.eq.s32.totalorder %s22, 1
      %p124 = por %p122, %p123
      %p125 = scmp.ne.s32.totalorder %s116, %s117
      %p126 = scmp.eq.s32.totalorder %s22, 0
      %p127 = por %p125, %p126
      %p128 = scmp.ne.s32.totalorder %s116, %s117
      %p129 = scmp.eq.s32.totalorder %s23, 1
      %p130 = por %p128, %p129
      %p132 = scmp.ne.s32.totalorder %s117, %s131
      %p133 = scmp.eq.s32.totalorder %s23, 0
      %p134 = por %p132, %p133
      %s136 = sadd.s32 %s135, 1
      %p139 = scmp.eq.s32.totalorder %s17, 1
      %p140 = scmp.ne.s32.totalorder %s135, %s137
      %p141 = scmp.eq.s32.totalorder %s17, 0
      %p142 = por %p140, %p141
      %p143 = scmp.ne.s32.totalorder %s135, %s137
      %p144 = scmp.eq.s32.totalorder %s22, 1
      %p145 = por %p143, %p144
      %p146 = scmp.ne.s32.totalorder %s137, %s138
      %p147 = scmp.eq.s32.totalorder %s22, 0
      %p148 = por %p146, %p147
      %p149 = scmp.ne.s32.totalorder %s137, %s138
      %p150 = scmp.eq.s32.totalorder %s23, 1
      %p151 = por %p149, %p150
      %p153 = scmp.ne.s32.totalorder %s138, %s152
      %p154 = scmp.eq.s32.totalorder %s23, 0
      %p155 = por %p153, %p154
      %s157 = sadd.s32 %s156, 1
      %p160 = scmp.eq.s32.totalorder %s17, 1
      %p161 = scmp.ne.s32.totalorder %s156, %s158
      %p162 = scmp.eq.s32.totalorder %s17, 0
      %p163 = por %p161, %p162
      %p164 = scmp.ne.s32.totalorder %s156, %s158
      %p165 = scmp.eq.s32.totalorder %s22, 1
      %p166 = por %p164, %p165
      %p167 = scmp.ne.s32.totalorder %s158, %s159
      %p168 = scmp.eq.s32.totalorder %s22, 0
      %p169 = por %p167, %p168
      %p170 = scmp.ne.s32.totalorder %s158, %s159
      %p171 = scmp.eq.s32.totalorder %s23, 1
      %p172 = por %p170, %p171
      %p174 = scmp.ne.s32.totalorder %s159, %s173
      %p175 = scmp.eq.s32.totalorder %s23, 0
      %p176 = por %p174, %p175
      %s178 = sadd.s32 %s177, 1
      %p181 = scmp.eq.s32.totalorder %s17, 1
      %p182 = scmp.ne.s32.totalorder %s177, %s179
      %p183 = scmp.eq.s32.totalorder %s17, 0
      %p184 = por %p182, %p183
      %p185 = scmp.ne.s32.totalorder %s177, %s179
      %p186 = scmp.eq.s32.totalorder %s22, 1
      %p187 = por %p185, %p186
      %p188 = scmp.ne.s32.totalorder %s179, %s180
      %p189 = scmp.eq.s32.totalorder %s22, 0
      %p190 = por %p188, %p189
      %p191 = scmp.ne.s32.totalorder %s179, %s180
      %p192 = scmp.eq.s32.totalorder %s23, 1
      %p193 = por %p191, %p192
      %p195 = scmp.ne.s32.totalorder %s180, %s194
      %p196 = scmp.eq.s32.totalorder %s23, 0
      %p197 = por %p195, %p196
      %s198 = ssub.s32 %s17, %s24
      %p199 = scmp.eq.s32.totalorder %s198, 0
      %s201 = sadd.s32 %s200, 1
      %s202 = scalar_select %p199, %s200, %s201
      %p205 = pneg %p199
      %p206 = scmp.eq.s32.totalorder %s17, 1
      %p207 = por %p205, %p206
      %p208 = scmp.ne.s32.totalorder %s200, %s203
      %p209 = scmp.eq.s32.totalorder %s17, 0
      %p210 = por %p208, %p209
      %p211 = scmp.ne.s32.totalorder %s200, %s203
      %p212 = scmp.eq.s32.totalorder %s22, 1
      %p213 = por %p211, %p212
      %p214 = scmp.ne.s32.totalorder %s203, %s204
      %p215 = scmp.eq.s32.totalorder %s22, 0
      %p216 = por %p214, %p215
      %p217 = scmp.ne.s32.totalorder %s203, %s204
      %p218 = scmp.eq.s32.totalorder %s23, 1
      %p219 = por %p217, %p218
      %p221 = scmp.ne.s32.totalorder %s204, %s220
      %p222 = scmp.eq.s32.totalorder %s23, 0
      %p223 = por %p221, %p222
      %s224 = ssub.s32 %s17, %s24
      %p225 = scmp.eq.s32.totalorder %s224, 0
      %s227 = sadd.s32 %s226, 1
      %s228 = scalar_select %p225, %s226, %s227
      %p231 = pneg %p225
      %p232 = scmp.eq.s32.totalorder %s17, 1
      %p233 = por %p231, %p232
      %p234 = scmp.ne.s32.totalorder %s226, %s229
      %p235 = scmp.eq.s32.totalorder %s17, 0
      %p236 = por %p234, %p235
      %p237 = scmp.ne.s32.totalorder %s226, %s229
      %p238 = scmp.eq.s32.totalorder %s22, 1
      %p239 = por %p237, %p238
      %p240 = scmp.ne.s32.totalorder %s229, %s230
      %p241 = scmp.eq.s32.totalorder %s22, 0
      %p242 = por %p240, %p241
      %p243 = scmp.ne.s32.totalorder %s229, %s230
      %p244 = scmp.eq.s32.totalorder %s23, 1
      %p245 = por %p243, %p244
      %p247 = scmp.ne.s32.totalorder %s230, %s246
      %p248 = scmp.eq.s32.totalorder %s23, 0
      %p249 = por %p247, %p248
      %p250 = scmp.le.s32.totalorder 1, %s17
      %p251 = scmp.lt.s32.totalorder %s17, 3
      %p252 = pnand %p250, %p251
      %p253 = pneg %p252
      // Predicated region
      $region9: #{tpu_custom_call.1} parent=5 // pred_check
        _
      $region10: #{tpu_custom_call.1} parent=5 // pred_check_branch
        %255 = sbr.rel (%p252) target = $region12
      $region11: #{tpu_custom_call.1} parent=5 // pred_region
        %s256 = ssub.s32 %s17, 1
        // Predicated region
        $region13: #{tpu_custom_call.1} parent=11 // pred_check
          %p257 = pneg %p64
        $region14: #{tpu_custom_call.1} parent=11 // pred_check_branch
          %259 = sbr.rel (%p257) target = $region16
        $region15: #{tpu_custom_call.1} parent=11 // pred_region
          _
        $region16: #{tpu_custom_call.1} parent=11 // pred_fallthru
          _
        // Predicated region
        $region17: #{tpu_custom_call.1} parent=11 // pred_check
          %p260 = pneg %p85
        $region18: #{tpu_custom_call.1} parent=11 // pred_check_branch
          %262 = sbr.rel (%p260) target = $region20
        $region19: #{tpu_custom_call.1} parent=11 // pred_region
          _
        $region20: #{tpu_custom_call.1} parent=11 // pred_fallthru
          _
        // Predicated region
        $region21: #{tpu_custom_call.1} parent=11 // pred_check
          %p263 = pneg %p106
        $region22: #{tpu_custom_call.1} parent=11 // pred_check_branch
          %265 = sbr.rel (%p263) target = $region24
        $region23: #{tpu_custom_call.1} parent=11 // pred_region
          %s267 = ssub.s32 1536, 1536
          %268 = vsyncadd [#allocation5], %s267
          %s269 = sshll.u32 [#allocation4], 4
          %s270 = int_to_ptr.vmem [resolvable:$true] %s269
          %275 = dma.hbm_to_vmem [thread:$0]  %s3, 1536, %s270, [#allocation5], 128, 128, 8
        $region24: #{tpu_custom_call.1} parent=11 // pred_fallthru
          _
        // Predicated region
        $region25: #{tpu_custom_call.1} parent=11 // pred_check
          %p276 = pneg %p127
        $region26: #{tpu_custom_call.1} parent=11 // pred_check_branch
          %278 = sbr.rel (%p276) target = $region28
        $region27: #{tpu_custom_call.1} parent=11 // pred_region
          _
        $region28: #{tpu_custom_call.1} parent=11 // pred_fallthru
          _
        // Predicated region
        $region29: #{tpu_custom_call.1} parent=11 // pred_check
          %p279 = pneg %p148
        $region30: #{tpu_custom_call.1} parent=11 // pred_check_branch
          %281 = sbr.rel (%p279) target = $region32
        $region31: #{tpu_custom_call.1} parent=11 // pred_region
          _
        $region32: #{tpu_custom_call.1} parent=11 // pred_fallthru
          _
        // Predicated region
        $region33: #{tpu_custom_call.1} parent=11 // pred_check
          %p282 = pneg %p169
        $region34: #{tpu_custom_call.1} parent=11 // pred_check_branch
          %284 = sbr.rel (%p282) target = $region36
        $region35: #{tpu_custom_call.1} parent=11 // pred_region
          _
        $region36: #{tpu_custom_call.1} parent=11 // pred_fallthru
          _
        // Predicated region
        $region37: #{tpu_custom_call.1} parent=11 // pred_check
          %p285 = pneg %p190
        $region38: #{tpu_custom_call.1} parent=11 // pred_check_branch
          %287 = sbr.rel (%p285) target = $region40
        $region39: #{tpu_custom_call.1} parent=11 // pred_region
          _
        $region40: #{tpu_custom_call.1} parent=11 // pred_fallthru
          _
      $region12: #{tpu_custom_call.1} parent=5 // pred_fallthru
        _
      %p288 = scmp.lt.s32.totalorder %s17, 2
      // Predicated region
      $region41: #{tpu_custom_call.1} parent=5 // pred_check
        %p289 = pneg %p288
      $region42: #{tpu_custom_call.1} parent=5 // pred_check_branch
        %291 = sbr.rel (%p289) target = $region44
      $region43: #{tpu_custom_call.1} parent=5 // pred_region
        // Predicated region
        $region45: #{tpu_custom_call.1} parent=43 // pred_check
          %p292 = pneg %p37
        $region46: #{tpu_custom_call.1} parent=43 // pred_check_branch
          %294 = sbr.rel (%p292) target = $region48
        $region47: #{tpu_custom_call.1} parent=43 // pred_region
          %p295 = scmp.lt.s32.totalorder %s17, 1
          %s296 = scalar_select %p295, %s17, 1
          %s297 = smul.addr %s296, 2
          %s298 = smul.addr %s297, 8
          %s299 = scalar_lea.vmem %s0, %s298
        $region48: #{tpu_custom_call.1} parent=43 // pred_fallthru
          _
      $region44: #{tpu_custom_call.1} parent=5 // pred_fallthru
        _
      %p300 = scmp.le.s32.totalorder 1, %s17
      %p301 = scmp.lt.s32.totalorder %s17, 3
      %p302 = pnand %p300, %p301
      %p303 = pneg %p302
      // Predicated region
      $region49: #{tpu_custom_call.1} parent=5 // pred_check
        _
      $region50: #{tpu_custom_call.1} parent=5 // pred_check_branch
        %305 = sbr.rel (%p302) target = $region52
      $region51: #{tpu_custom_call.1} parent=5 // pred_region
        %s306 = ssub.s32 %s17, 1
        // Predicated region
        $region53: #{tpu_custom_call.1} parent=51 // pred_check
          %p307 = pneg %p106
        $region54: #{tpu_custom_call.1} parent=51 // pred_check_branch
          %309 = sbr.rel (%p307) target = $region56
        $region55: #{tpu_custom_call.1} parent=51 // pred_region
          %310 = dma.done [#allocation5], 1536
        $region56: #{tpu_custom_call.1} parent=51 // pred_fallthru
          _
        %p311 = scmp.lt.s32.totalorder %s22, 1
        %s312 = scalar_select %p311, %s22, 1
        %s313 = smul.addr %s312, 2
        %s314 = smul.addr %s313, 8
        %s315 = scalar_lea.vmem %s0, %s314
        %p316 = pneg %p43
        %p317 = pneg %p40
        %p318 = pneg %p64
        %p319 = pneg %p61
        %p320 = pneg %p85
        %p321 = pneg %p82
        %p322 = pneg %p106
        %p323 = pneg %p103
        %p324 = pneg %p127
        %p325 = pneg %p124
        %p326 = pneg %p148
        %p327 = pneg %p145
        %p328 = pneg %p169
        %p329 = pneg %p166
        %p330 = pneg %p190
        %p331 = pneg %p187
        %p332 = pneg %p216
        %p333 = pneg %p213
        %p334 = scmp.lt.s32.totalorder %s22, 1
        %s335 = scalar_select %p334, %s22, 1
        %s336 = smul.addr %s335, 2
        %s337 = smul.addr %s336, 8
        %s338 = scalar_lea.vmem %s8, %s337
        %p339 = pneg %p242
        %p340 = pneg %p239
        %s341 = sand.u32 %s229, 1
        %s342 = sand.u32 %s229, 1
        %s343 = smul.addr %s342, 64
        %s344 = scalar_lea.vmem [#allocation6], %s343
        %p345 = scmp.lt.s32.totalorder %s22, 1
        %s346 = scalar_select %p345, %s22, 1
        %s347 = smul.addr %s346, 2
        %s348 = smul.addr %s347, 8
        %s349 = scalar_lea.vmem %s0, %s348
        %p350 = scmp.lt.s32.totalorder %s22, 1
        %s351 = scalar_select %p350, %s22, 1
        %s352 = smul.addr %s351, 2
        %s353 = smul.addr %s352, 8
        %s354 = scalar_lea.vmem %s8, %s353
        %v355 = vld [vmem:[%s349] sm:$0xff]
        %v356 = vld [vmem:[%s349 + $0x8] sm:$0x1]
        %vm357 = vcmask 253952
        %358 = vst.msk [vmem:[#allocation2] sm:$0x1] %vm357, 0.0
        %359 = vst.msk [vmem:[#allocation2 + $0x9] sm:$0x1] %vm357, 0.0
        %vm360 = vcmask 261121
        %361 = vst.msk [vmem:[#allocation2] sm:$0xfe] %vm360, %v355
        %362 = vst.msk [vmem:[#allocation2 + $0x8] sm:$0x1] %vm357, %v356
        %v363 = vld [vmem:[%s1] sm:$0x7]
        %v364 = vld [vmem:[%s1 + $0x4] sm:$0x7]
        %v365 = vld [vmem:[%s1 + $0x8] sm:$0x7]
        %v366 = vld [vmem:[%s2] sm:$0x1]
        %v367 = vld [vmem:[%s2 + $0x1] sm:$0x1]
        %v368 = vld [vmem:[%s2 + $0x2] sm:$0x1]
        %v369 = vld [vmem:[%s5] sm:$0x1]
        %v370 = vld [vmem:[%s5 + $0x1] sm:$0x1]
        %v371 = vld [vmem:[%s5 + $0x2] sm:$0x1]
        %v372 = vld [vmem:[%s6] sm:$0x1]
        %v373 = vld [vmem:[%s6 + $0x1] sm:$0x1]
        %v374 = vld [vmem:[%s6 + $0x2] sm:$0x1]
        %v375 = vld [vmem:[#allocation2] sm:$0xff]
        %v376 = vlaneseq
        %v377 = vshrl.u32 %v376, 7
        %v378 = vsub.s32 0, %v377
        %v379 = vrot.slane %v363, %v378
        %v380 = vmul.f32 %v375, %v379
        %v381 = vld [vmem:[#allocation2 + $0x1] sm:$0xff]
        %v382 = vlaneseq
        %v383 = vshrl.u32 %v382, 7
        %v384 = vsub.s32 1, %v383
        %v385 = vrot.slane %v363, %v384
        %v386 = vmul.f32 %v381, %v385
        %v387 = vadd.f32 %v380, %v386
        %v388 = vld [vmem:[#allocation2 + $0x2] sm:$0xff]
        %v389 = vlaneseq
        %v390 = vshrl.u32 %v389, 7
        %v391 = vsub.s32 2, %v390
        %v392 = vrot.slane %v363, %v391
        %v393 = vmul.f32 %v388, %v392
        %v394 = vadd.f32 %v387, %v393
        %v396 = vlaneseq
        %v397 = vshrl.u32 %v396, 7
        %v398 = vsub.s32 0, %v397
        %v399 = vrot.slane %v366, %v398
        %v401 = vadd.f32 %v394, %v399
        %v402 = vld [vmem:[#allocation4] sm:$0xff]
        %v403 = vld [vmem:[#allocation4 + $0x8] sm:$0xff]
        %v404 = vld [vmem:[#allocation4 + $0x10] sm:$0xff]
        %v405 = vld [vmem:[#allocation4 + $0x18] sm:$0xff]
        %vm406 = vcmask 261120
        %v408 = vsel %vm406, %v401, 0
        %410 = vmatprep.subr.mxu0 0.0
        %411 = vmatpush1.msra.mxu0 %v402
        %412 = vmatprep.subr.mxu0 0.0
        %413 = vmatpush1.msra.mxu0 %v403
        %414 = vmatprep.subr.mxu0 0.0
        %415 = vmatpush1.msra.mxu0 %v404
        %416 = vmatprep.subr.mxu0 0.0
        %417 = vmatpush1.msra.mxu0 %v405
        %418 = vmatprep.subr.mxu0 0.0
        %419 = vmatpush1.msra.mxu0 0.0
        %420 = vmatprep.subr.mxu0 0.0
        %421 = vmatpush1.msra.mxu0 0.0
        %422 = vmatprep.subr.mxu0 0.0
        %423 = vmatpush1.msra.mxu0 0.0
        %424 = vmatprep.subr.mxu0 0.0
        %425 = vmatpush1.msra.mxu0 0.0
        %426 = vmatprep.subr.mxu0 0.0
        %427 = vmatpush1.msra.mxu0 0.0
        %428 = vmatprep.subr.mxu0 0.0
        %429 = vmatpush1.msra.mxu0 0.0
        %430 = vmatprep.subr.mxu0 0.0
        %431 = vmatpush1.msra.mxu0 0.0
        %432 = vmatprep.subr.mxu0 0.0
        %433 = vmatpush1.msra.mxu0 0.0
        %434 = vmatprep.subr.mxu0 0.0
        %435 = vmatpush1.msra.mxu0 0.0
        %436 = vmatprep.subr.mxu0 0.0
        %437 = vmatpush1.msra.mxu0 0.0
        %438 = vmatprep.subr.mxu0 0.0
        %439 = vmatpush1.msra.mxu0 0.0
        %440 = vmatprep.subr.mxu0 0.0
        %441 = vmatpush1.msra.mxu0 0.0
        %442 = vmatprep.subr.mxu0 0.0
        %443 = vmatpush1.msra.mxu0 0.0
        %444 = vmatprep.subr.mxu0 0.0
        %445 = vmatpush1.msra.mxu0 0.0
        %446 = vmatprep.subr.mxu0 0.0
        %447 = vmatpush1.msra.mxu0 0.0
        %448 = vmatprep.subr.mxu0 0.0
        %449 = vmatpush1.msra.mxu0 0.0
        %450 = vmatprep.subr.mxu0 0.0
        %451 = vmatpush1.msra.mxu0 0.0
        %452 = vmatprep.subr.mxu0 0.0
        %453 = vmatpush1.msra.mxu0 0.0
        %454 = vmatprep.subr.mxu0 0.0
        %455 = vmatpush1.msra.mxu0 0.0
        %456 = vmatprep.subr.mxu0 0.0
        %457 = vmatpush1.msra.mxu0 0.0
        %458 = vmatprep.subr.mxu0 0.0
        %459 = vmatpush1.msra.mxu0 0.0
        %460 = vmatprep.subr.mxu0 0.0
        %461 = vmatpush1.msra.mxu0 0.0
        %462 = vmatprep.subr.mxu0 0.0
        %463 = vmatpush1.msra.mxu0 0.0
        %464 = vmatprep.subr.mxu0 0.0
        %465 = vmatpush1.msra.mxu0 0.0
        %466 = vmatprep.subr.mxu0 0.0
        %467 = vmatpush1.msra.mxu0 0.0
        %468 = vmatprep.subr.mxu0 0.0
        %469 = vmatpush1.msra.mxu0 0.0
        %470 = vmatprep.subr.mxu0 0.0
        %471 = vmatpush1.msra.mxu0 0.0
        %472 = vmatprep.subr.mxu0 0.0
        %473 = vmatpush1.msra.mxu0 0.0
        %474 = vmatprep.mubr.f32.mxu0 0.0
        %475 = vmatmul.mubr.f32.gmra.mrb[0].mxu0 %v408
        %v476 = vpop.f32.mrb[0].mxu0
        %v477 = vadd.f32 0.0, %v476
        %v478 = vpop.f32.mrb[0].mxu0
        %479 = vdwg.mxu0
        %v480 = vld [vmem:[%s4] sm:$0x1]
        %v482 = vlaneseq
        %v483 = vshrl.u32 %v482, 7
        %v484 = vsub.s32 0, %v483
        %v485 = vrot.slane %v480, %v484
        %v487 = vadd.f32 %v477, %v485
        %v488 = vsel %vm406, %v487, 0.0
        %489 = vadd.xlane.f32.xlu0 %v488
        %v490 = vpop.xlane.xlu0 %489
        %v491 = vrcp.pop 32.0
        %v492 = vmul.f32 %v490, %v491
        %v493 = vsub.f32 %v487, %v492
        %v494 = vmul.f32 %v493, %v493
        %v495 = vsel %vm406, %v494, 0.0
        %496 = vadd.xlane.f32.xlu0 %v495
        %v497 = vpop.xlane.xlu0 %496
        %v498 = vmul.f32 %v497, %v491
        %v499 = vadd.f32 %v498, 1e-05
        %v500 = vrsqrt.pop %v499
        %v501 = vmul.f32 %v493, %v500
        %v503 = vlaneseq
        %v504 = vshrl.u32 %v503, 7
        %v505 = vsub.s32 0, %v504
        %v506 = vrot.slane %v369, %v505
        %v508 = vmul.f32 %v501, %v506
        %v510 = vlaneseq
        %v511 = vshrl.u32 %v510, 7
        %v512 = vsub.s32 0, %v511
        %v513 = vrot.slane %v372, %v512
        %v515 = vadd.f32 %v508, %v513
        %v516 = vld [vmem:[#allocation2] ss:$2 sm:$0xf]
        %v517 = vlaneseq
        %v518 = vshrl.u32 %v517, 7
        %v519 = vsub.s32 0, %v518
        %v520 = vrot.slane %v364, %v519
        %v521 = vmul.f32 %v516, %v520
        %s522 = scalar_lea.vmem [#allocation2], 1
        %v523 = vld [vmem:[%s522] ss:$2 sm:$0xf]
        %v524 = vlaneseq
        %v525 = vshrl.u32 %v524, 7
        %v526 = vsub.s32 1, %v525
        %v527 = vrot.slane %v364, %v526
        %v528 = vmul.f32 %v523, %v527
        %v529 = vadd.f32 %v521, %v528
        %s530 = scalar_lea.vmem [#allocation2], 2
        %v531 = vld [vmem:[%s530] ss:$2 sm:$0xf]
        %v532 = vlaneseq
        %v533 = vshrl.u32 %v532, 7
        %v534 = vsub.s32 2, %v533
        %v535 = vrot.slane %v364, %v534
        %v536 = vmul.f32 %v531, %v535
        %v537 = vadd.f32 %v529, %v536
        %v539 = vlaneseq
        %v540 = vshrl.u32 %v539, 7
        %v541 = vsub.s32 0, %v540
        %v542 = vrot.slane %v367, %v541
        %v544 = vadd.f32 %v537, %v542
        %s545 = scalar_lea.vmem [#allocation4], 32
        %v546 = vld [vmem:[%s545] sm:$0xff]
        %v547 = vld [vmem:[%s545 + $0x8] sm:$0xff]
        %v548 = vld [vmem:[%s545 + $0x10] sm:$0xff]
        %v549 = vld [vmem:[%s545 + $0x18] sm:$0xff]
        %v551 = vsel %vm406, %v544, 0
        %553 = vmatprep.subr.mxu0 0.0
        %554 = vmatpush1.msra.mxu0 %v546
        %555 = vmatprep.subr.mxu0 0.0
        %556 = vmatpush1.msra.mxu0 %v547
        %557 = vmatprep.subr.mxu0 0.0
        %558 = vmatpush1.msra.mxu0 %v548
        %559 = vmatprep.subr.mxu0 0.0
        %560 = vmatpush1.msra.mxu0 %v549
        %561 = vmatprep.subr.mxu0 0.0
        %562 = vmatpush1.msra.mxu0 0.0
        %563 = vmatprep.subr.mxu0 0.0
        %564 = vmatpush1.msra.mxu0 0.0
        %565 = vmatprep.subr.mxu0 0.0
        %566 = vmatpush1.msra.mxu0 0.0
        %567 = vmatprep.subr.mxu0 0.0
        %568 = vmatpush1.msra.mxu0 0.0
        %569 = vmatprep.subr.mxu0 0.0
        %570 = vmatpush1.msra.mxu0 0.0
        %571 = vmatprep.subr.mxu0 0.0
        %572 = vmatpush1.msra.mxu0 0.0
        %573 = vmatprep.subr.mxu0 0.0
        %574 = vmatpush1.msra.mxu0 0.0
        %575 = vmatprep.subr.mxu0 0.0
        %576 = vmatpush1.msra.mxu0 0.0
        %577 = vmatprep.subr.mxu0 0.0
        %578 = vmatpush1.msra.mxu0 0.0
        %579 = vmatprep.subr.mxu0 0.0
        %580 = vmatpush1.msra.mxu0 0.0
        %581 = vmatprep.subr.mxu0 0.0
        %582 = vmatpush1.msra.mxu0 0.0
        %583 = vmatprep.subr.mxu0 0.0
        %584 = vmatpush1.msra.mxu0 0.0
        %585 = vmatprep.subr.mxu0 0.0
        %586 = vmatpush1.msra.mxu0 0.0
        %587 = vmatprep.subr.mxu0 0.0
        %588 = vmatpush1.msra.mxu0 0.0
        %589 = vmatprep.subr.mxu0 0.0
        %590 = vmatpush1.msra.mxu0 0.0
        %591 = vmatprep.subr.mxu0 0.0
        %592 = vmatpush1.msra.mxu0 0.0
        %593 = vmatprep.subr.mxu0 0.0
        %594 = vmatpush1.msra.mxu0 0.0
        %595 = vmatprep.subr.mxu0 0.0
        %596 = vmatpush1.msra.mxu0 0.0
        %597 = vmatprep.subr.mxu0 0.0
        %598 = vmatpush1.msra.mxu0 0.0
        %599 = vmatprep.subr.mxu0 0.0
        %600 = vmatpush1.msra.mxu0 0.0
        %601 = vmatprep.subr.mxu0 0.0
        %602 = vmatpush1.msra.mxu0 0.0
        %603 = vmatprep.subr.mxu0 0.0
        %604 = vmatpush1.msra.mxu0 0.0
        %605 = vmatprep.subr.mxu0 0.0
        %606 = vmatpush1.msra.mxu0 0.0
        %607 = vmatprep.subr.mxu0 0.0
        %608 = vmatpush1.msra.mxu0 0.0
        %609 = vmatprep.subr.mxu0 0.0
        %610 = vmatpush1.msra.mxu0 0.0
        %611 = vmatprep.subr.mxu0 0.0
        %612 = vmatpush1.msra.mxu0 0.0
        %613 = vmatprep.subr.mxu0 0.0
        %614 = vmatpush1.msra.mxu0 0.0
        %615 = vmatprep.subr.mxu0 0.0
        %616 = vmatpush1.msra.mxu0 0.0
        %617 = vmatprep.mubr.f32.mxu0 0.0
        %618 = vmatmul.mubr.f32.gmra.mrb[0].mxu0 %v551
        %v619 = vpop.f32.mrb[0].mxu0
        %v620 = vadd.f32 0.0, %v619
        %v621 = vpop.f32.mrb[0].mxu0
        %622 = vdwg.mxu0
        %s623 = scalar_lea.vmem %s4, 1
        %v624 = vld [vmem:[%s623] sm:$0x1]
        %v626 = vlaneseq
        %v627 = vshrl.u32 %v626, 7
        %v628 = vsub.s32 0, %v627
        %v629 = vrot.slane %v624, %v628
        %v631 = vadd.f32 %v620, %v629
        %vm632 = vcmask 257024
        %v633 = vsel %vm632, %v631, 0.0
        %634 = vadd.xlane.f32.xlu0 %v633
        %v635 = vpop.xlane.xlu0 %634
        %v636 = vmul.f32 %v635, %v491
        %v637 = vsub.f32 %v631, %v636
        %v638 = vmul.f32 %v637, %v637
        %v639 = vsel %vm632, %v638, 0.0
        %640 = vadd.xlane.f32.xlu0 %v639
        %v641 = vpop.xlane.xlu0 %640
        %v642 = vmul.f32 %v641, %v491
        %v643 = vadd.f32 %v642, 1e-05
        %v644 = vrsqrt.pop %v643
        %v645 = vmul.f32 %v637, %v644
        %v647 = vlaneseq
        %v648 = vshrl.u32 %v647, 7
        %v649 = vsub.s32 0, %v648
        %v650 = vrot.slane %v370, %v649
        %v652 = vmul.f32 %v645, %v650
        %v654 = vlaneseq
        %v655 = vshrl.u32 %v654, 7
        %v656 = vsub.s32 0, %v655
        %v657 = vrot.slane %v373, %v656
        %v659 = vadd.f32 %v652, %v657
        %v660 = vlaneseq
        %v661 = vshrl.u32 %v660, 7
        %v662 = vsub.s32 0, %v661
        %v663 = vrot.slane %v365, %v662
        %v664 = vmul.f32 %v516, %v663
        %v665 = vlaneseq
        %v666 = vshrl.u32 %v665, 7
        %v667 = vsub.s32 1, %v666
        %v668 = vrot.slane %v365, %v667
        %v669 = vmul.f32 %v523, %v668
        %v670 = vadd.f32 %v664, %v669
        %v671 = vlaneseq
        %v672 = vshrl.u32 %v671, 7
        %v673 = vsub.s32 2, %v672
        %v674 = vrot.slane %v365, %v673
        %v675 = vmul.f32 %v531, %v674
        %v676 = vadd.f32 %v670, %v675
        %v678 = vlaneseq
        %v679 = vshrl.u32 %v678, 7
        %v680 = vsub.s32 0, %v679
        %v681 = vrot.slane %v368, %v680
        %v683 = vadd.f32 %v676, %v681
        %s684 = scalar_lea.vmem [#allocation4], 64
        %v685 = vld [vmem:[%s684] sm:$0xff]
        %v686 = vld [vmem:[%s684 + $0x8] sm:$0xff]
        %v687 = vld [vmem:[%s684 + $0x10] sm:$0xff]
        %v688 = vld [vmem:[%s684 + $0x18] sm:$0xff]
        %v690 = vsel %vm406, %v683, 0
        %692 = vmatprep.subr.mxu0 0.0
        %693 = vmatpush1.msra.mxu0 %v685
        %694 = vmatprep.subr.mxu0 0.0
        %695 = vmatpush1.msra.mxu0 %v686
        %696 = vmatprep.subr.mxu0 0.0
        %697 = vmatpush1.msra.mxu0 %v687
        %698 = vmatprep.subr.mxu0 0.0
        %699 = vmatpush1.msra.mxu0 %v688
        %700 = vmatprep.subr.mxu0 0.0
        %701 = vmatpush1.msra.mxu0 0.0
        %702 = vmatprep.subr.mxu0 0.0
        %703 = vmatpush1.msra.mxu0 0.0
        %704 = vmatprep.subr.mxu0 0.0
        %705 = vmatpush1.msra.mxu0 0.0
        %706 = vmatprep.subr.mxu0 0.0
        %707 = vmatpush1.msra.mxu0 0.0
        %708 = vmatprep.subr.mxu0 0.0
        %709 = vmatpush1.msra.mxu0 0.0
        %710 = vmatprep.subr.mxu0 0.0
        %711 = vmatpush1.msra.mxu0 0.0
        %712 = vmatprep.subr.mxu0 0.0
        %713 = vmatpush1.msra.mxu0 0.0
        %714 = vmatprep.subr.mxu0 0.0
        %715 = vmatpush1.msra.mxu0 0.0
        %716 = vmatprep.subr.mxu0 0.0
        %717 = vmatpush1.msra.mxu0 0.0
        %718 = vmatprep.subr.mxu0 0.0
        %719 = vmatpush1.msra.mxu0 0.0
        %720 = vmatprep.subr.mxu0 0.0
        %721 = vmatpush1.msra.mxu0 0.0
        %722 = vmatprep.subr.mxu0 0.0
        %723 = vmatpush1.msra.mxu0 0.0
        %724 = vmatprep.subr.mxu0 0.0
        %725 = vmatpush1.msra.mxu0 0.0
        %726 = vmatprep.subr.mxu0 0.0
        %727 = vmatpush1.msra.mxu0 0.0
        %728 = vmatprep.subr.mxu0 0.0
        %729 = vmatpush1.msra.mxu0 0.0
        %730 = vmatprep.subr.mxu0 0.0
        %731 = vmatpush1.msra.mxu0 0.0
        %732 = vmatprep.subr.mxu0 0.0
        %733 = vmatpush1.msra.mxu0 0.0
        %734 = vmatprep.subr.mxu0 0.0
        %735 = vmatpush1.msra.mxu0 0.0
        %736 = vmatprep.subr.mxu0 0.0
        %737 = vmatpush1.msra.mxu0 0.0
        %738 = vmatprep.subr.mxu0 0.0
        %739 = vmatpush1.msra.mxu0 0.0
        %740 = vmatprep.subr.mxu0 0.0
        %741 = vmatpush1.msra.mxu0 0.0
        %742 = vmatprep.subr.mxu0 0.0
        %743 = vmatpush1.msra.mxu0 0.0
        %744 = vmatprep.subr.mxu0 0.0
        %745 = vmatpush1.msra.mxu0 0.0
        %746 = vmatprep.subr.mxu0 0.0
        %747 = vmatpush1.msra.mxu0 0.0
        %748 = vmatprep.subr.mxu0 0.0
        %749 = vmatpush1.msra.mxu0 0.0
        %750 = vmatprep.subr.mxu0 0.0
        %751 = vmatpush1.msra.mxu0 0.0
        %752 = vmatprep.subr.mxu0 0.0
        %753 = vmatpush1.msra.mxu0 0.0
        %754 = vmatprep.subr.mxu0 0.0
        %755 = vmatpush1.msra.mxu0 0.0
        %756 = vmatprep.mubr.f32.mxu0 0.0
        %757 = vmatmul.mubr.f32.gmra.mrb[0].mxu0 %v690
        %v758 = vpop.f32.mrb[0].mxu0
        %v759 = vadd.f32 0.0, %v758
        %v760 = vpop.f32.mrb[0].mxu0
        %761 = vdwg.mxu0
        %s762 = scalar_lea.vmem %s4, 2
        %v763 = vld [vmem:[%s762] sm:$0x1]
        %v765 = vlaneseq
        %v766 = vshrl.u32 %v765, 7
        %v767 = vsub.s32 0, %v766
        %v768 = vrot.slane %v763, %v767
        %v770 = vadd.f32 %v759, %v768
        %v771 = vsel %vm632, %v770, 0.0
        %772 = vadd.xlane.f32.xlu0 %v771
        %v773 = vpop.xlane.xlu0 %772
        %v774 = vmul.f32 %v773, %v491
        %v775 = vsub.f32 %v770, %v774
        %v776 = vmul.f32 %v775, %v775
        %v777 = vsel %vm632, %v776, 0.0
        %778 = vadd.xlane.f32.xlu0 %v777
        %v779 = vpop.xlane.xlu0 %778
        %v780 = vmul.f32 %v779, %v491
        %v781 = vadd.f32 %v780, 1e-05
        %v782 = vrsqrt.pop %v781
        %v783 = vmul.f32 %v775, %v782
        %v785 = vlaneseq
        %v786 = vshrl.u32 %v785, 7
        %v787 = vsub.s32 0, %v786
        %v788 = vrot.slane %v371, %v787
        %v790 = vmul.f32 %v783, %v788
        %v792 = vlaneseq
        %v793 = vshrl.u32 %v792, 7
        %v794 = vsub.s32 0, %v793
        %v795 = vrot.slane %v374, %v794
        %v797 = vadd.f32 %v790, %v795
        %v799 = vrot.slane %v515, 7
        %vm801 = vcmask 1040384
        %v802 = vsel %vm801, %v355, %v799
        %v804 = vrot.slane %v659, 7
        %v806 = vsel %vm801, %v355, %v804
        %vm807 = vcmask 1044480
        %v808 = vsel %vm807, %v806, 0.0
        %v810 = vrot.slane %v797, 7
        %v812 = vsel %vm801, %v355, %v810
        %v813 = vsel %vm807, %v812, 0.0
        %v814 = vlaneseq
        %v815 = vand.u32 %v814, 127
        %vm816 = vcmp.lt.s32.totalorder %v815, 5
        %vm817 = vcmask 64512
        %v819 = vsel %vm817, %v802, 0
        %v821 = vsel %vm817, %v799, 0
        %v824 = vsel %vm817, %v808, 0
        %v827 = vsel %vm817, 0.0, 0
        %829 = vmatprep.subr.mxu0 0.0
        %830 = vmatpush1.xpose.msra.mxu0 %v824
        %831 = vmatprep.subr.mxu0 0.0
        %832 = vmatpush1.xpose.msra.mxu0 %v827
        %833 = vmatprep.subr.mxu0 0.0
        %834 = vmatpush1.xpose.msra.mxu0 %v827
        %835 = vmatprep.subr.mxu0 0.0
        %836 = vmatpush1.xpose.msra.mxu0 %v827
        %837 = vmatprep.subr.mxu0 0.0
        %838 = vmatpush1.xpose.msra.mxu0 %v827
        %839 = vmatprep.subr.mxu0 0.0
        %840 = vmatpush1.xpose.msra.mxu0 %v827
        %841 = vmatprep.subr.mxu0 0.0
        %842 = vmatpush1.xpose.msra.mxu0 %v827
        %843 = vmatprep.subr.mxu0 0.0
        %844 = vmatpush1.xpose.msra.mxu0 %v827
        %845 = vmatprep.subr.mxu0 0.0
        %846 = vmatpush1.xpose.msra.mxu0 %v827
        %847 = vmatprep.subr.mxu0 0.0
        %848 = vmatpush1.xpose.msra.mxu0 %v827
        %849 = vmatprep.subr.mxu0 0.0
        %850 = vmatpush1.xpose.msra.mxu0 %v827
        %851 = vmatprep.subr.mxu0 0.0
        %852 = vmatpush1.xpose.msra.mxu0 %v827
        %853 = vmatprep.subr.mxu0 0.0
        %854 = vmatpush1.xpose.msra.mxu0 %v827
        %855 = vmatprep.subr.mxu0 0.0
        %856 = vmatpush1.xpose.msra.mxu0 %v827
        %857 = vmatprep.subr.mxu0 0.0
        %858 = vmatpush1.xpose.msra.mxu0 %v827
        %859 = vmatprep.subr.mxu0 0.0
        %860 = vmatpush1.xpose.msra.mxu0 %v827
        %861 = vmatprep.subr.mxu0 0.0
        %862 = vmatpush1.xpose.msra.mxu0 0.0
        %863 = vmatprep.subr.mxu0 0.0
        %864 = vmatpush1.xpose.msra.mxu0 0.0
        %865 = vmatprep.subr.mxu0 0.0
        %866 = vmatpush1.xpose.msra.mxu0 0.0
        %867 = vmatprep.subr.mxu0 0.0
        %868 = vmatpush1.xpose.msra.mxu0 0.0
        %869 = vmatprep.subr.mxu0 0.0
        %870 = vmatpush1.xpose.msra.mxu0 0.0
        %871 = vmatprep.subr.mxu0 0.0
        %872 = vmatpush1.xpose.msra.mxu0 0.0
        %873 = vmatprep.subr.mxu0 0.0
        %874 = vmatpush1.xpose.msra.mxu0 0.0
        %875 = vmatprep.subr.mxu0 0.0
        %876 = vmatpush1.xpose.msra.mxu0 0.0
        %877 = vmatprep.subr.mxu0 0.0
        %878 = vmatpush1.xpose.msra.mxu0 0.0
        %879 = vmatprep.subr.mxu0 0.0
        %880 = vmatpush1.xpose.msra.mxu0 0.0
        %881 = vmatprep.subr.mxu0 0.0
        %882 = vmatpush1.xpose.msra.mxu0 0.0
        %883 = vmatprep.subr.mxu0 0.0
        %884 = vmatpush1.xpose.msra.mxu0 0.0
        %885 = vmatprep.subr.mxu0 0.0
        %886 = vmatpush1.xpose.msra.mxu0 0.0
        %887 = vmatprep.subr.mxu0 0.0
        %888 = vmatpush1.xpose.msra.mxu0 0.0
        %889 = vmatprep.subr.mxu0 0.0
        %890 = vmatpush1.xpose.msra.mxu0 0.0
        %891 = vmatprep.subr.mxu0 0.0
        %892 = vmatpush1.xpose.msra.mxu0 0.0
        %893 = vmatprep.mubr.f32.mxu0 0.0
        %894 = vmatmul.mubr.f32.gmra.mrb[0].mxu0 %v819
        %v895 = vpop.f32.mrb[0].mxu0
        %v896 = vadd.f32 0.0, %v895
        %v897 = vpop.f32.mrb[0].mxu0
        %898 = vmatprep.mubr.f32.mxu0 0.0
        %899 = vmatmul.mubr.f32.gmra.mrb[0].mxu0 %v821
        %v900 = vpop.f32.mrb[0].mxu0
        %v901 = vadd.f32 0.0, %v900
        %v902 = vpop.f32.mrb[0].mxu0
        %903 = vdwg.mxu0
        %v904 = vmul.f32 %v896, 0.35355338
        %v905 = vmul.f32 %v901, 0.35355338
        %v906 = vsel %vm816, %v904, -1e+30
        %v907 = vsel %vm816, %v905, -1e+30
        %908 = vmax.xlane.f32.xlu0 %v906
        %v909 = vpop.xlane.xlu0 %908
        %v910 = vsel %vm801, %v907, -inf
        %911 = vmax.xlane.f32.xlu0 %v910
        %v912 = vpop.xlane.xlu0 %911
        %v913 = vsub.f32 %v906, %v909
        %v914 = vsub.f32 %v907, %v912
        %v915 = vmul.f32 %v913, 1.442695
        %v916 = vpow.pop %v915
        %v917 = vmul.f32 %v914, 1.442695
        %v918 = vpow.pop %v917
        %919 = vadd.xlane.f32.xlu0 %v916
        %v920 = vpop.xlane.xlu0 %919
        %v921 = vsel %vm801, %v918, 0.0
        %922 = vadd.xlane.f32.xlu0 %v921
        %v923 = vpop.xlane.xlu0 %922
        %v924 = vrcp.pop %v920
        %v925 = vmul.f32 %v916, %v924
        %v926 = vrcp.pop %v923
        %v927 = vmul.f32 %v918, %v926
        %928 = vst [vmem:[%s344] sm:$0xff] %v925
        %929 = vst [vmem:[%s344 + $0x8] sm:$0x1] %v927
        %930 = vmatprep.subr.mxu0 0.0
        %931 = vmatpush1.msra.mxu0 %v813
        %932 = vmatprep.subr.mxu0 0.0
        %933 = vmatpush1.msra.mxu0 0.0
        %934 = vmatprep.subr.mxu0 0.0
        %935 = vmatpush1.msra.mxu0 0.0
        %936 = vmatprep.subr.mxu0 0.0
        %937 = vmatpush1.msra.mxu0 0.0
        %938 = vmatprep.subr.mxu0 0.0
        %939 = vmatpush1.msra.mxu0 0.0
        %940 = vmatprep.subr.mxu0 0.0
        %941 = vmatpush1.msra.mxu0 0.0
        %942 = vmatprep.subr.mxu0 0.0
        %943 = vmatpush1.msra.mxu0 0.0
        %944 = vmatprep.subr.mxu0 0.0
        %945 = vmatpush1.msra.mxu0 0.0
        %946 = vmatprep.subr.mxu0 0.0
        %947 = vmatpush1.msra.mxu0 0.0
        %948 = vmatprep.subr.mxu0 0.0
        %949 = vmatpush1.msra.mxu0 0.0
        %950 = vmatprep.subr.mxu0 0.0
        %951 = vmatpush1.msra.mxu0 0.0
        %952 = vmatprep.subr.mxu0 0.0
        %953 = vmatpush1.msra.mxu0 0.0
        %954 = vmatprep.subr.mxu0 0.0
        %955 = vmatpush1.msra.mxu0 0.0
        %956 = vmatprep.subr.mxu0 0.0
        %957 = vmatpush1.msra.mxu0 0.0
        %958 = vmatprep.subr.mxu0 0.0
        %959 = vmatpush1.msra.mxu0 0.0
        %960 = vmatprep.subr.mxu0 0.0
        %961 = vmatpush1.msra.mxu0 0.0
        %962 = vmatprep.subr.mxu0 0.0
        %963 = vmatpush1.msra.mxu0 0.0
        %964 = vmatprep.subr.mxu0 0.0
        %965 = vmatpush1.msra.mxu0 0.0
        %966 = vmatprep.subr.mxu0 0.0
        %967 = vmatpush1.msra.mxu0 0.0
        %968 = vmatprep.subr.mxu0 0.0
        %969 = vmatpush1.msra.mxu0 0.0
        %970 = vmatprep.subr.mxu0 0.0
        %971 = vmatpush1.msra.mxu0 0.0
        %972 = vmatprep.subr.mxu0 0.0
        %973 = vmatpush1.msra.mxu0 0.0
        %974 = vmatprep.subr.mxu0 0.0
        %975 = vmatpush1.msra.mxu0 0.0
        %976 = vmatprep.subr.mxu0 0.0
        %977 = vmatpush1.msra.mxu0 0.0
        %978 = vmatprep.subr.mxu0 0.0
        %979 = vmatpush1.msra.mxu0 0.0
        %980 = vmatprep.subr.mxu0 0.0
        %981 = vmatpush1.msra.mxu0 0.0
        %982 = vmatprep.subr.mxu0 0.0
        %983 = vmatpush1.msra.mxu0 0.0
        %984 = vmatprep.subr.mxu0 0.0
        %985 = vmatpush1.msra.mxu0 0.0
        %986 = vmatprep.subr.mxu0 0.0
        %987 = vmatpush1.msra.mxu0 0.0
        %988 = vmatprep.subr.mxu0 0.0
        %989 = vmatpush1.msra.mxu0 0.0
        %990 = vmatprep.subr.mxu0 0.0
        %991 = vmatpush1.msra.mxu0 0.0
        %992 = vmatprep.subr.mxu0 0.0
        %993 = vmatpush1.msra.mxu0 0.0
        %994 = vmatprep.mubr.f32.mxu0 0.0
        %995 = vmatmul.mubr.f32.gmra.mrb[0].mxu0 %v925
        %v996 = vpop.f32.mrb[0].mxu0
        %v997 = vadd.f32 0.0, %v996
        %v998 = vpop.f32.mrb[0].mxu0
        %999 = vmatprep.mubr.f32.mxu0 0.0
        %1000 = vmatmul.mubr.f32.gmra.mrb[0].mxu0 %v927
        %v1001 = vpop.f32.mrb[0].mxu0
        %v1002 = vadd.f32 0.0, %v1001
        %v1003 = vpop.f32.mrb[0].mxu0
        %1004 = vdwg.mxu0
        %1005 = vst.msk [vmem:[#allocation3] sm:$0xff] %vm817, %v997
        %vm1006 = vcmask 57344
        %1007 = vst.msk [vmem:[#allocation3 + $0x8] sm:$0x1] %vm1006, %v1002
        %1008 = vrot.lane.b32.xlu0 %v802, 120
        %v1009 = vpop.permute.xlu0 %1008
        %1010 = vrot.lane.b32.xlu0 %v799, 120
        %v1011 = vpop.permute.xlu0 %1010
        %1012 = vrot.lane.b32.xlu0 %v808, 120
        %v1013 = vpop.permute.xlu0 %1012
        %1014 = vrot.lane.b32.xlu0 0.0, 120
        %v1015 = vpop.permute.xlu0 %1014
        %v1016 = vsel %vm817, %v1009, 0
        %v1018 = vsel %vm817, %v1011, 0
        %v1020 = vsel %vm817, %v1013, 0
        %v1022 = vsel %vm817, %v1015, 0
        %1024 = vmatprep.subr.mxu0 0.0
        %1025 = vmatpush1.xpose.msra.mxu0 %v1020
        %1026 = vmatprep.subr.mxu0 0.0
        %1027 = vmatpush1.xpose.msra.mxu0 %v1022
        %1028 = vmatprep.subr.mxu0 0.0
        %1029 = vmatpush1.xpose.msra.mxu0 %v1022
        %1030 = vmatprep.subr.mxu0 0.0
        %1031 = vmatpush1.xpose.msra.mxu0 %v1022
        %1032 = vmatprep.subr.mxu0 0.0
        %1033 = vmatpush1.xpose.msra.mxu0 %v1022
        %1034 = vmatprep.subr.mxu0 0.0
        %1035 = vmatpush1.xpose.msra.mxu0 %v1022
        %1036 = vmatprep.subr.mxu0 0.0
        %1037 = vmatpush1.xpose.msra.mxu0 %v1022
        %1038 = vmatprep.subr.mxu0 0.0
        %1039 = vmatpush1.xpose.msra.mxu0 %v1022
        %1040 = vmatprep.subr.mxu0 0.0
        %1041 = vmatpush1.xpose.msra.mxu0 %v1022
        %1042 = vmatprep.subr.mxu0 0.0
        %1043 = vmatpush1.xpose.msra.mxu0 %v1022
        %1044 = vmatprep.subr.mxu0 0.0
        %1045 = vmatpush1.xpose.msra.mxu0 %v1022
        %1046 = vmatprep.subr.mxu0 0.0
        %1047 = vmatpush1.xpose.msra.mxu0 %v1022
        %1048 = vmatprep.subr.mxu0 0.0
        %1049 = vmatpush1.xpose.msra.mxu0 %v1022
        %1050 = vmatprep.subr.mxu0 0.0
        %1051 = vmatpush1.xpose.msra.mxu0 %v1022
        %1052 = vmatprep.subr.mxu0 0.0
        %1053 = vmatpush1.xpose.msra.mxu0 %v1022
        %1054 = vmatprep.subr.mxu0 0.0
        %1055 = vmatpush1.xpose.msra.mxu0 %v1022
        %1056 = vmatprep.subr.mxu0 0.0
        %1057 = vmatpush1.xpose.msra.mxu0 0.0
        %1058 = vmatprep.subr.mxu0 0.0
        %1059 = vmatpush1.xpose.msra.mxu0 0.0
        %1060 = vmatprep.subr.mxu0 0.0
        %1061 = vmatpush1.xpose.msra.mxu0 0.0
        %1062 = vmatprep.subr.mxu0 0.0
        %1063 = vmatpush1.xpose.msra.mxu0 0.0
        %1064 = vmatprep.subr.mxu0 0.0
        %1065 = vmatpush1.xpose.msra.mxu0 0.0
        %1066 = vmatprep.subr.mxu0 0.0
        %1067 = vmatpush1.xpose.msra.mxu0 0.0
        %1068 = vmatprep.subr.mxu0 0.0
        %1069 = vmatpush1.xpose.msra.mxu0 0.0
        %1070 = vmatprep.subr.mxu0 0.0
        %1071 = vmatpush1.xpose.msra.mxu0 0.0
        %1072 = vmatprep.subr.mxu0 0.0
        %1073 = vmatpush1.xpose.msra.mxu0 0.0
        %1074 = vmatprep.subr.mxu0 0.0
        %1075 = vmatpush1.xpose.msra.mxu0 0.0
        %1076 = vmatprep.subr.mxu0 0.0
        %1077 = vmatpush1.xpose.msra.mxu0 0.0
        %1078 = vmatprep.subr.mxu0 0.0
        %1079 = vmatpush1.xpose.msra.mxu0 0.0
        %1080 = vmatprep.subr.mxu0 0.0
        %1081 = vmatpush1.xpose.msra.mxu0 0.0
        %1082 = vmatprep.subr.mxu0 0.0
        %1083 = vmatpush1.xpose.msra.mxu0 0.0
        %1084 = vmatprep.subr.mxu0 0.0
        %1085 = vmatpush1.xpose.msra.mxu0 0.0
        %1086 = vmatprep.subr.mxu0 0.0
        %1087 = vmatpush1.xpose.msra.mxu0 0.0
        %1088 = vmatprep.mubr.f32.mxu0 0.0
        %1089 = vmatmul.mubr.f32.gmra.mrb[0].mxu0 %v1016
        %v1090 = vpop.f32.mrb[0].mxu0
        %v1091 = vadd.f32 0.0, %v1090
        %v1092 = vpop.f32.mrb[0].mxu0
        %1093 = vmatprep.mubr.f32.mxu0 0.0
        %1094 = vmatmul.mubr.f32.gmra.mrb[0].mxu0 %v1018
        %v1095 = vpop.f32.mrb[0].mxu0
        %v1096 = vadd.f32 0.0, %v1095
        %v1097 = vpop.f32.mrb[0].mxu0
        %1098 = vdwg.mxu0
        %v1099 = vmul.f32 %v1091, 0.35355338
        %v1100 = vmul.f32 %v1096, 0.35355338
        %v1101 = vsel %vm816, %v1099, -1e+30
        %v1102 = vsel %vm816, %v1100, -1e+30
        %1103 = vmax.xlane.f32.xlu0 %v1101
        %v1104 = vpop.xlane.xlu0 %1103
        %v1105 = vsel %vm801, %v1102, -inf
        %1106 = vmax.xlane.f32.xlu0 %v1105
        %v1107 = vpop.xlane.xlu0 %1106
        %v1108 = vsub.f32 %v1101, %v1104
        %v1109 = vsub.f32 %v1102, %v1107
        %v1110 = vmul.f32 %v1108, 1.442695
        %v1111 = vpow.pop %v1110
        %v1112 = vmul.f32 %v1109, 1.442695
        %v1113 = vpow.pop %v1112
        %1114 = vadd.xlane.f32.xlu0 %v1111
        %v1115 = vpop.xlane.xlu0 %1114
        %v1116 = vsel %vm801, %v1113, 0.0
        %1117 = vadd.xlane.f32.xlu0 %v1116
        %v1118 = vpop.xlane.xlu0 %1117
        %v1119 = vrcp.pop %v1115
        %v1120 = vmul.f32 %v1111, %v1119
        %v1121 = vrcp.pop %v1118
        %v1122 = vmul.f32 %v1113, %v1121
        %s1123 = scalar_lea.vmem %s344, 16 [#allocation6]
        %1124 = vst [vmem:[%s1123] sm:$0xff] %v1120
        %1125 = vst [vmem:[%s1123 + $0x8] sm:$0x1] %v1122
        %1127 = vrot.lane.b32.xlu0 %v813, 120
        %v1128 = vpop.permute.xlu0 %1127
        %1131 = vmatprep.subr.mxu0 0.0
        %1132 = vmatpush1.msra.mxu0 %v1128
        %1133 = vmatprep.subr.mxu0 0.0
        %1134 = vmatpush1.msra.mxu0 %v1015
        %1135 = vmatprep.subr.mxu0 0.0
        %1136 = vmatpush1.msra.mxu0 %v1015
        %1137 = vmatprep.subr.mxu0 0.0
        %1138 = vmatpush1.msra.mxu0 %v1015
        %1139 = vmatprep.subr.mxu0 0.0
        %1140 = vmatpush1.msra.mxu0 %v1015
        %1141 = vmatprep.subr.mxu0 0.0
        %1142 = vmatpush1.msra.mxu0 %v1015
        %1143 = vmatprep.subr.mxu0 0.0
        %1144 = vmatpush1.msra.mxu0 %v1015
        %1145 = vmatprep.subr.mxu0 0.0
        %1146 = vmatpush1.msra.mxu0 %v1015
        %1147 = vmatprep.subr.mxu0 0.0
        %1148 = vmatpush1.msra.mxu0 %v1015
        %1149 = vmatprep.subr.mxu0 0.0
        %1150 = vmatpush1.msra.mxu0 %v1015
        %1151 = vmatprep.subr.mxu0 0.0
        %1152 = vmatpush1.msra.mxu0 %v1015
        %1153 = vmatprep.subr.mxu0 0.0
        %1154 = vmatpush1.msra.mxu0 %v1015
        %1155 = vmatprep.subr.mxu0 0.0
        %1156 = vmatpush1.msra.mxu0 %v1015
        %1157 = vmatprep.subr.mxu0 0.0
        %1158 = vmatpush1.msra.mxu0 %v1015
        %1159 = vmatprep.subr.mxu0 0.0
        %1160 = vmatpush1.msra.mxu0 %v1015
        %1161 = vmatprep.subr.mxu0 0.0
        %1162 = vmatpush1.msra.mxu0 %v1015
        %1163 = vmatprep.subr.mxu0 0.0
        %1164 = vmatpush1.msra.mxu0 0.0
        %1165 = vmatprep.subr.mxu0 0.0
        %1166 = vmatpush1.msra.mxu0 0.0
        %1167 = vmatprep.subr.mxu0 0.0
        %1168 = vmatpush1.msra.mxu0 0.0
        %1169 = vmatprep.subr.mxu0 0.0
        %1170 = vmatpush1.msra.mxu0 0.0
        %1171 = vmatprep.subr.mxu0 0.0
        %1172 = vmatpush1.msra.mxu0 0.0
        %1173 = vmatprep.subr.mxu0 0.0
        %1174 = vmatpush1.msra.mxu0 0.0
        %1175 = vmatprep.subr.mxu0 0.0
        %1176 = vmatpush1.msra.mxu0 0.0
        %1177 = vmatprep.subr.mxu0 0.0
        %1178 = vmatpush1.msra.mxu0 0.0
        %1179 = vmatprep.subr.mxu0 0.0
        %1180 = vmatpush1.msra.mxu0 0.0
        %1181 = vmatprep.subr.mxu0 0.0
        %1182 = vmatpush1.msra.mxu0 0.0
        %1183 = vmatprep.subr.mxu0 0.0
        %1184 = vmatpush1.msra.mxu0 0.0
        %1185 = vmatprep.subr.mxu0 0.0
        %1186 = vmatpush1.msra.mxu0 0.0
        %1187 = vmatprep.subr.mxu0 0.0
        %1188 = vmatpush1.msra.mxu0 0.0
        %1189 = vmatprep.subr.mxu0 0.0
        %1190 = vmatpush1.msra.mxu0 0.0
        %1191 = vmatprep.subr.mxu0 0.0
        %1192 = vmatpush1.msra.mxu0 0.0
        %1193 = vmatprep.subr.mxu0 0.0
        %1194 = vmatpush1.msra.mxu0 0.0
        %1195 = vmatprep.mubr.f32.mxu0 0.0
        %1196 = vmatmul.mubr.f32.gmra.mrb[0].mxu0 %v1120
        %v1197 = vpop.f32.mrb[0].mxu0
        %v1198 = vadd.f32 0.0, %v1197
        %v1199 = vpop.f32.mrb[0].mxu0
        %1200 = vmatprep.mubr.f32.mxu0 0.0
        %1201 = vmatmul.mubr.f32.gmra.mrb[0].mxu0 %v1122
        %v1202 = vpop.f32.mrb[0].mxu0
        %v1203 = vadd.f32 0.0, %v1202
        %v1204 = vpop.f32.mrb[0].mxu0
        %1205 = vdwg.mxu0
        %1208 = vrot.lane.b32.xlu0 %v1198, 8
        %v1209 = vpop.permute.xlu0 %1208
        %1210 = vrot.lane.b32.xlu0 %v1203, 8
        %v1211 = vpop.permute.xlu0 %1210
        %vm1214 = vcmask 130112
        %1215 = vst.msk [vmem:[#allocation3] sm:$0xff] %vm1214, %v1209
        %vm1216 = vcmask 122944
        %1217 = vst.msk [vmem:[#allocation3 + $0x8] sm:$0x1] %vm1216, %v1211
        %1218 = vrot.lane.b32.xlu0 %v802, 112
        %v1219 = vpop.permute.xlu0 %1218
        %1220 = vrot.lane.b32.xlu0 %v799, 112
        %v1221 = vpop.permute.xlu0 %1220
        %1222 = vrot.lane.b32.xlu0 %v808, 112
        %v1223 = vpop.permute.xlu0 %1222
        %1224 = vrot.lane.b32.xlu0 0.0, 112
        %v1225 = vpop.permute.xlu0 %1224
        %v1226 = vsel %vm817, %v1219, 0
        %v1228 = vsel %vm817, %v1221, 0
        %v1230 = vsel %vm817, %v1223, 0
        %v1232 = vsel %vm817, %v1225, 0
        %1234 = vmatprep.subr.mxu0 0.0
        %1235 = vmatpush1.xpose.msra.mxu0 %v1230
        %1236 = vmatprep.subr.mxu0 0.0
        %1237 = vmatpush1.xpose.msra.mxu0 %v1232
        %1238 = vmatprep.subr.mxu0 0.0
        %1239 = vmatpush1.xpose.msra.mxu0 %v1232
        %1240 = vmatprep.subr.mxu0 0.0
        %1241 = vmatpush1.xpose.msra.mxu0 %v1232
        %1242 = vmatprep.subr.mxu0 0.0
        %1243 = vmatpush1.xpose.msra.mxu0 %v1232
        %1244 = vmatprep.subr.mxu0 0.0
        %1245 = vmatpush1.xpose.msra.mxu0 %v1232
        %1246 = vmatprep.subr.mxu0 0.0
        %1247 = vmatpush1.xpose.msra.mxu0 %v1232
        %1248 = vmatprep.subr.mxu0 0.0
        %1249 = vmatpush1.xpose.msra.mxu0 %v1232
        %1250 = vmatprep.subr.mxu0 0.0
        %1251 = vmatpush1.xpose.msra.mxu0 %v1232
        %1252 = vmatprep.subr.mxu0 0.0
        %1253 = vmatpush1.xpose.msra.mxu0 %v1232
        %1254 = vmatprep.subr.mxu0 0.0
        %1255 = vmatpush1.xpose.msra.mxu0 %v1232
        %1256 = vmatprep.subr.mxu0 0.0
        %1257 = vmatpush1.xpose.msra.mxu0 %v1232
        %1258 = vmatprep.subr.mxu0 0.0
        %1259 = vmatpush1.xpose.msra.mxu0 %v1232
        %1260 = vmatprep.subr.mxu0 0.0
        %1261 = vmatpush1.xpose.msra.mxu0 %v1232
        %1262 = vmatprep.subr.mxu0 0.0
        %1263 = vmatpush1.xpose.msra.mxu0 %v1232
        %1264 = vmatprep.subr.mxu0 0.0
        %1265 = vmatpush1.xpose.msra.mxu0 %v1232
        %1266 = vmatprep.subr.mxu0 0.0
        %1267 = vmatpush1.xpose.msra.mxu0 0.0
        %1268 = vmatprep.subr.mxu0 0.0
        %1269 = vmatpush1.xpose.msra.mxu0 0.0
        %1270 = vmatprep.subr.mxu0 0.0
        %1271 = vmatpush1.xpose.msra.mxu0 0.0
        %1272 = vmatprep.subr.mxu0 0.0
        %1273 = vmatpush1.xpose.msra.mxu0 0.0
        %1274 = vmatprep.subr.mxu0 0.0
        %1275 = vmatpush1.xpose.msra.mxu0 0.0
        %1276 = vmatprep.subr.mxu0 0.0
        %1277 = vmatpush1.xpose.msra.mxu0 0.0
        %1278 = vmatprep.subr.mxu0 0.0
        %1279 = vmatpush1.xpose.msra.mxu0 0.0
        %1280 = vmatprep.subr.mxu0 0.0
        %1281 = vmatpush1.xpose.msra.mxu0 0.0
        %1282 = vmatprep.subr.mxu0 0.0
        %1283 = vmatpush1.xpose.msra.mxu0 0.0
        %1284 = vmatprep.subr.mxu0 0.0
        %1285 = vmatpush1.xpose.msra.mxu0 0.0
        %1286 = vmatprep.subr.mxu0 0.0
        %1287 = vmatpush1.xpose.msra.mxu0 0.0
        %1288 = vmatprep.subr.mxu0 0.0
        %1289 = vmatpush1.xpose.msra.mxu0 0.0
        %1290 = vmatprep.subr.mxu0 0.0
        %1291 = vmatpush1.xpose.msra.mxu0 0.0
        %1292 = vmatprep.subr.mxu0 0.0
        %1293 = vmatpush1.xpose.msra.mxu0 0.0
        %1294 = vmatprep.subr.mxu0 0.0
        %1295 = vmatpush1.xpose.msra.mxu0 0.0
        %1296 = vmatprep.subr.mxu0 0.0
        %1297 = vmatpush1.xpose.msra.mxu0 0.0
        %1298 = vmatprep.mubr.f32.mxu0 0.0
        %1299 = vmatmul.mubr.f32.gmra.mrb[0].mxu0 %v1226
        %v1300 = vpop.f32.mrb[0].mxu0
        %v1301 = vadd.f32 0.0, %v1300
        %v1302 = vpop.f32.mrb[0].mxu0
        %1303 = vmatprep.mubr.f32.mxu0 0.0
        %1304 = vmatmul.mubr.f32.gmra.mrb[0].mxu0 %v1228
        %v1305 = vpop.f32.mrb[0].mxu0
        %v1306 = vadd.f32 0.0, %v1305
        %v1307 = vpop.f32.mrb[0].mxu0
        %1308 = vdwg.mxu0
        %v1309 = vmul.f32 %v1301, 0.35355338
        %v1310 = vmul.f32 %v1306, 0.35355338
        %v1311 = vsel %vm816, %v1309, -1e+30
        %v1312 = vsel %vm816, %v1310, -1e+30
        %1313 = vmax.xlane.f32.xlu0 %v1311
        %v1314 = vpop.xlane.xlu0 %1313
        %v1315 = vsel %vm801, %v1312, -inf
        %1316 = vmax.xlane.f32.xlu0 %v1315
        %v1317 = vpop.xlane.xlu0 %1316
        %v1318 = vsub.f32 %v1311, %v1314
        %v1319 = vsub.f32 %v1312, %v1317
        %v1320 = vmul.f32 %v1318, 1.442695
        %v1321 = vpow.pop %v1320
        %v1322 = vmul.f32 %v1319, 1.442695
        %v1323 = vpow.pop %v1322
        %1324 = vadd.xlane.f32.xlu0 %v1321
        %v1325 = vpop.xlane.xlu0 %1324
        %v1326 = vsel %vm801, %v1323, 0.0
        %1327 = vadd.xlane.f32.xlu0 %v1326
        %v1328 = vpop.xlane.xlu0 %1327
        %v1329 = vrcp.pop %v1325
        %v1330 = vmul.f32 %v1321, %v1329
        %v1331 = vrcp.pop %v1328
        %v1332 = vmul.f32 %v1323, %v1331
        %s1333 = scalar_lea.vmem %s344, 32 [#allocation6]
        %1334 = vst [vmem:[%s1333] sm:$0xff] %v1330
        %1335 = vst [vmem:[%s1333 + $0x8] sm:$0x1] %v1332
        %1336 = vrot.lane.b32.xlu0 %v813, 112
        %v1337 = vpop.permute.xlu0 %1336
        %1340 = vmatprep.subr.mxu0 0.0
        %1341 = vmatpush1.msra.mxu0 %v1337
        %1342 = vmatprep.subr.mxu0 0.0
        %1343 = vmatpush1.msra.mxu0 %v1225
        %1344 = vmatprep.subr.mxu0 0.0
        %1345 = vmatpush1.msra.mxu0 %v1225
        %1346 = vmatprep.subr.mxu0 0.0
        %1347 = vmatpush1.msra.mxu0 %v1225
        %1348 = vmatprep.subr.mxu0 0.0
        %1349 = vmatpush1.msra.mxu0 %v1225
        %1350 = vmatprep.subr.mxu0 0.0
        %1351 = vmatpush1.msra.mxu0 %v1225
        %1352 = vmatprep.subr.mxu0 0.0
        %1353 = vmatpush1.msra.mxu0 %v1225
        %1354 = vmatprep.subr.mxu0 0.0
        %1355 = vmatpush1.msra.mxu0 %v1225
        %1356 = vmatprep.subr.mxu0 0.0
        %1357 = vmatpush1.msra.mxu0 %v1225
        %1358 = vmatprep.subr.mxu0 0.0
        %1359 = vmatpush1.msra.mxu0 %v1225
        %1360 = vmatprep.subr.mxu0 0.0
        %1361 = vmatpush1.msra.mxu0 %v1225
        %1362 = vmatprep.subr.mxu0 0.0
        %1363 = vmatpush1.msra.mxu0 %v1225
        %1364 = vmatprep.subr.mxu0 0.0
        %1365 = vmatpush1.msra.mxu0 %v1225
        %1366 = vmatprep.subr.mxu0 0.0
        %1367 = vmatpush1.msra.mxu0 %v1225
        %1368 = vmatprep.subr.mxu0 0.0
        %1369 = vmatpush1.msra.mxu0 %v1225
        %1370 = vmatprep.subr.mxu0 0.0
        %1371 = vmatpush1.msra.mxu0 %v1225
        %1372 = vmatprep.subr.mxu0 0.0
        %1373 = vmatpush1.msra.mxu0 0.0
        %1374 = vmatprep.subr.mxu0 0.0
        %1375 = vmatpush1.msra.mxu0 0.0
        %1376 = vmatprep.subr.mxu0 0.0
        %1377 = vmatpush1.msra.mxu0 0.0
        %1378 = vmatprep.subr.mxu0 0.0
        %1379 = vmatpush1.msra.mxu0 0.0
        %1380 = vmatprep.subr.mxu0 0.0
        %1381 = vmatpush1.msra.mxu0 0.0
        %1382 = vmatprep.subr.mxu0 0.0
        %1383 = vmatpush1.msra.mxu0 0.0
        %1384 = vmatprep.subr.mxu0 0.0
        %1385 = vmatpush1.msra.mxu0 0.0
        %1386 = vmatprep.subr.mxu0 0.0
        %1387 = vmatpush1.msra.mxu0 0.0
        %1388 = vmatprep.subr.mxu0 0.0
        %1389 = vmatpush1.msra.mxu0 0.0
        %1390 = vmatprep.subr.mxu0 0.0
        %1391 = vmatpush1.msra.mxu0 0.0
        %1392 = vmatprep.subr.mxu0 0.0
        %1393 = vmatpush1.msra.mxu0 0.0
        %1394 = vmatprep.subr.mxu0 0.0
        %1395 = vmatpush1.msra.mxu0 0.0
        %1396 = vmatprep.subr.mxu0 0.0
        %1397 = vmatpush1.msra.mxu0 0.0
        %1398 = vmatprep.subr.mxu0 0.0
        %1399 = vmatpush1.msra.mxu0 0.0
        %1400 = vmatprep.subr.mxu0 0.0
        %1401 = vmatpush1.msra.mxu0 0.0
        %1402 = vmatprep.subr.mxu0 0.0
        %1403 = vmatpush1.msra.mxu0 0.0
        %1404 = vmatprep.mubr.f32.mxu0 0.0
        %1405 = vmatmul.mubr.f32.gmra.mrb[0].mxu0 %v1330
        %v1406 = vpop.f32.mrb[0].mxu0
        %v1407 = vadd.f32 0.0, %v1406
        %v1408 = vpop.f32.mrb[0].mxu0
        %1409 = vmatprep.mubr.f32.mxu0 0.0
        %1410 = vmatmul.mubr.f32.gmra.mrb[0].mxu0 %v1332
        %v1411 = vpop.f32.mrb[0].mxu0
        %v1412 = vadd.f32 0.0, %v1411
        %v1413 = vpop.f32.mrb[0].mxu0
        %1414 = vdwg.mxu0
        %1417 = vrot.lane.b32.xlu0 %v1407, 16
        %v1418 = vpop.permute.xlu0 %1417
        %1419 = vrot.lane.b32.xlu0 %v1412, 16
        %v1420 = vpop.permute.xlu0 %1419
        %vm1423 = vcmask 195712
        %1424 = vst.msk [vmem:[#allocation3] sm:$0xff] %vm1423, %v1418
        %vm1425 = vcmask 188544
        %1426 = vst.msk [vmem:[#allocation3 + $0x8] sm:$0x1] %vm1425, %v1420
        %1427 = vrot.lane.b32.xlu0 %v802, 104
        %v1428 = vpop.permute.xlu0 %1427
        %1429 = vrot.lane.b32.xlu0 %v799, 104
        %v1430 = vpop.permute.xlu0 %1429
        %1431 = vrot.lane.b32.xlu0 %v808, 104
        %v1432 = vpop.permute.xlu0 %1431
        %1433 = vrot.lane.b32.xlu0 0.0, 104
        %v1434 = vpop.permute.xlu0 %1433
        %v1435 = vsel %vm817, %v1428, 0
        %v1437 = vsel %vm817, %v1430, 0
        %v1439 = vsel %vm817, %v1432, 0
        %v1441 = vsel %vm817, %v1434, 0
        %1443 = vmatprep.subr.mxu0 0.0
        %1444 = vmatpush1.xpose.msra.mxu0 %v1439
        %1445 = vmatprep.subr.mxu0 0.0
        %1446 = vmatpush1.xpose.msra.mxu0 %v1441
        %1447 = vmatprep.subr.mxu0 0.0
        %1448 = vmatpush1.xpose.msra.mxu0 %v1441
        %1449 = vmatprep.subr.mxu0 0.0
        %1450 = vmatpush1.xpose.msra.mxu0 %v1441
        %1451 = vmatprep.subr.mxu0 0.0
        %1452 = vmatpush1.xpose.msra.mxu0 %v1441
        %1453 = vmatprep.subr.mxu0 0.0
        %1454 = vmatpush1.xpose.msra.mxu0 %v1441
        %1455 = vmatprep.subr.mxu0 0.0
        %1456 = vmatpush1.xpose.msra.mxu0 %v1441
        %1457 = vmatprep.subr.mxu0 0.0
        %1458 = vmatpush1.xpose.msra.mxu0 %v1441
        %1459 = vmatprep.subr.mxu0 0.0
        %1460 = vmatpush1.xpose.msra.mxu0 %v1441
        %1461 = vmatprep.subr.mxu0 0.0
        %1462 = vmatpush1.xpose.msra.mxu0 %v1441
        %1463 = vmatprep.subr.mxu0 0.0
        %1464 = vmatpush1.xpose.msra.mxu0 %v1441
        %1465 = vmatprep.subr.mxu0 0.0
        %1466 = vmatpush1.xpose.msra.mxu0 %v1441
        %1467 = vmatprep.subr.mxu0 0.0
        %1468 = vmatpush1.xpose.msra.mxu0 %v1441
        %1469 = vmatprep.subr.mxu0 0.0
        %1470 = vmatpush1.xpose.msra.mxu0 %v1441
        %1471 = vmatprep.subr.mxu0 0.0
        %1472 = vmatpush1.xpose.msra.mxu0 %v1441
        %1473 = vmatprep.subr.mxu0 0.0
        %1474 = vmatpush1.xpose.msra.mxu0 %v1441
        %1475 = vmatprep.subr.mxu0 0.0
        %1476 = vmatpush1.xpose.msra.mxu0 0.0
        %1477 = vmatprep.subr.mxu0 0.0
        %1478 = vmatpush1.xpose.msra.mxu0 0.0
        %1479 = vmatprep.subr.mxu0 0.0
        %1480 = vmatpush1.xpose.msra.mxu0 0.0
        %1481 = vmatprep.subr.mxu0 0.0
        %1482 = vmatpush1.xpose.msra.mxu0 0.0
        %1483 = vmatprep.subr.mxu0 0.0
        %1484 = vmatpush1.xpose.msra.mxu0 0.0
        %1485 = vmatprep.subr.mxu0 0.0
        %1486 = vmatpush1.xpose.msra.mxu0 0.0
        %1487 = vmatprep.subr.mxu0 0.0
        %1488 = vmatpush1.xpose.msra.mxu0 0.0
        %1489 = vmatprep.subr.mxu0 0.0
        %1490 = vmatpush1.xpose.msra.mxu0 0.0
        %1491 = vmatprep.subr.mxu0 0.0
        %1492 = vmatpush1.xpose.msra.mxu0 0.0
        %1493 = vmatprep.subr.mxu0 0.0
        %1494 = vmatpush1.xpose.msra.mxu0 0.0
        %1495 = vmatprep.subr.mxu0 0.0
        %1496 = vmatpush1.xpose.msra.mxu0 0.0
        %1497 = vmatprep.subr.mxu0 0.0
        %1498 = vmatpush1.xpose.msra.mxu0 0.0
        %1499 = vmatprep.subr.mxu0 0.0
        %1500 = vmatpush1.xpose.msra.mxu0 0.0
        %1501 = vmatprep.subr.mxu0 0.0
        %1502 = vmatpush1.xpose.msra.mxu0 0.0
        %1503 = vmatprep.subr.mxu0 0.0
        %1504 = vmatpush1.xpose.msra.mxu0 0.0
        %1505 = vmatprep.subr.mxu0 0.0
        %1506 = vmatpush1.xpose.msra.mxu0 0.0
        %1507 = vmatprep.mubr.f32.mxu0 0.0
        %1508 = vmatmul.mubr.f32.gmra.mrb[0].mxu0 %v1435
        %v1509 = vpop.f32.mrb[0].mxu0
        %v1510 = vadd.f32 0.0, %v1509
        %v1511 = vpop.f32.mrb[0].mxu0
        %1512 = vmatprep.mubr.f32.mxu0 0.0
        %1513 = vmatmul.mubr.f32.gmra.mrb[0].mxu0 %v1437
        %v1514 = vpop.f32.mrb[0].mxu0
        %v1515 = vadd.f32 0.0, %v1514
        %v1516 = vpop.f32.mrb[0].mxu0
        %1517 = vdwg.mxu0
        %v1518 = vmul.f32 %v1510, 0.35355338
        %v1519 = vmul.f32 %v1515, 0.35355338
        %v1520 = vsel %vm816, %v1518, -1e+30
        %v1521 = vsel %vm816, %v1519, -1e+30
        %1522 = vmax.xlane.f32.xlu0 %v1520
        %v1523 = vpop.xlane.xlu0 %1522
        %v1524 = vsel %vm801, %v1521, -inf
        %1525 = vmax.xlane.f32.xlu0 %v1524
        %v1526 = vpop.xlane.xlu0 %1525
        %v1527 = vsub.f32 %v1520, %v1523
        %v1528 = vsub.f32 %v1521, %v1526
        %v1529 = vmul.f32 %v1527, 1.442695
        %v1530 = vpow.pop %v1529
        %v1531 = vmul.f32 %v1528, 1.442695
        %v1532 = vpow.pop %v1531
        %1533 = vadd.xlane.f32.xlu0 %v1530
        %v1534 = vpop.xlane.xlu0 %1533
        %v1535 = vsel %vm801, %v1532, 0.0
        %1536 = vadd.xlane.f32.xlu0 %v1535
        %v1537 = vpop.xlane.xlu0 %1536
        %v1538 = vrcp.pop %v1534
        %v1539 = vmul.f32 %v1530, %v1538
        %v1540 = vrcp.pop %v1537
        %v1541 = vmul.f32 %v1532, %v1540
        %s1542 = scalar_lea.vmem %s344, 48 [#allocation6]
        %1543 = vst [vmem:[%s1542] sm:$0xff] %v1539
        %1544 = vst [vmem:[%s1542 + $0x8] sm:$0x1] %v1541
        %1545 = vrot.lane.b32.xlu0 %v813, 104
        %v1546 = vpop.permute.xlu0 %1545
        %1549 = vmatprep.subr.mxu0 0.0
        %1550 = vmatpush1.msra.mxu0 %v1546
        %1551 = vmatprep.subr.mxu0 0.0
        %1552 = vmatpush1.msra.mxu0 %v1434
        %1553 = vmatprep.subr.mxu0 0.0
        %1554 = vmatpush1.msra.mxu0 %v1434
        %1555 = vmatprep.subr.mxu0 0.0
        %1556 = vmatpush1.msra.mxu0 %v1434
        %1557 = vmatprep.subr.mxu0 0.0
        %1558 = vmatpush1.msra.mxu0 %v1434
        %1559 = vmatprep.subr.mxu0 0.0
        %1560 = vmatpush1.msra.mxu0 %v1434
        %1561 = vmatprep.subr.mxu0 0.0
        %1562 = vmatpush1.msra.mxu0 %v1434
        %1563 = vmatprep.subr.mxu0 0.0
        %1564 = vmatpush1.msra.mxu0 %v1434
        %1565 = vmatprep.subr.mxu0 0.0
        %1566 = vmatpush1.msra.mxu0 %v1434
        %1567 = vmatprep.subr.mxu0 0.0
        %1568 = vmatpush1.msra.mxu0 %v1434
        %1569 = vmatprep.subr.mxu0 0.0
        %1570 = vmatpush1.msra.mxu0 %v1434
        %1571 = vmatprep.subr.mxu0 0.0
        %1572 = vmatpush1.msra.mxu0 %v1434
        %1573 = vmatprep.subr.mxu0 0.0
        %1574 = vmatpush1.msra.mxu0 %v1434
        %1575 = vmatprep.subr.mxu0 0.0
        %1576 = vmatpush1.msra.mxu0 %v1434
        %1577 = vmatprep.subr.mxu0 0.0
        %1578 = vmatpush1.msra.mxu0 %v1434
        %1579 = vmatprep.subr.mxu0 0.0
        %1580 = vmatpush1.msra.mxu0 %v1434
        %1581 = vmatprep.subr.mxu0 0.0
        %1582 = vmatpush1.msra.mxu0 0.0
        %1583 = vmatprep.subr.mxu0 0.0
        %1584 = vmatpush1.msra.mxu0 0.0
        %1585 = vmatprep.subr.mxu0 0.0
        %1586 = vmatpush1.msra.mxu0 0.0
        %1587 = vmatprep.subr.mxu0 0.0
        %1588 = vmatpush1.msra.mxu0 0.0
        %1589 = vmatprep.subr.mxu0 0.0
        %1590 = vmatpush1.msra.mxu0 0.0
        %1591 = vmatprep.subr.mxu0 0.0
        %1592 = vmatpush1.msra.mxu0 0.0
        %1593 = vmatprep.subr.mxu0 0.0
        %1594 = vmatpush1.msra.mxu0 0.0
        %1595 = vmatprep.subr.mxu0 0.0
        %1596 = vmatpush1.msra.mxu0 0.0
        %1597 = vmatprep.subr.mxu0 0.0
        %1598 = vmatpush1.msra.mxu0 0.0
        %1599 = vmatprep.subr.mxu0 0.0
        %1600 = vmatpush1.msra.mxu0 0.0
        %1601 = vmatprep.subr.mxu0 0.0
        %1602 = vmatpush1.msra.mxu0 0.0
        %1603 = vmatprep.subr.mxu0 0.0
        %1604 = vmatpush1.msra.mxu0 0.0
        %1605 = vmatprep.subr.mxu0 0.0
        %1606 = vmatpush1.msra.mxu0 0.0
        %1607 = vmatprep.subr.mxu0 0.0
        %1608 = vmatpush1.msra.mxu0 0.0
        %1609 = vmatprep.subr.mxu0 0.0
        %1610 = vmatpush1.msra.mxu0 0.0
        %1611 = vmatprep.subr.mxu0 0.0
        %1612 = vmatpush1.msra.mxu0 0.0
        %1613 = vmatprep.mubr.f32.mxu0 0.0
        %1614 = vmatmul.mubr.f32.gmra.mrb[0].mxu0 %v1539
        %v1615 = vpop.f32.mrb[0].mxu0
        %v1616 = vadd.f32 0.0, %v1615
        %v1617 = vpop.f32.mrb[0].mxu0
        %1618 = vmatprep.mubr.f32.mxu0 0.0
        %1619 = vmatmul.mubr.f32.gmra.mrb[0].mxu0 %v1541
        %v1620 = vpop.f32.mrb[0].mxu0
        %v1621 = vadd.f32 0.0, %v1620
        %v1622 = vpop.f32.mrb[0].mxu0
        %1623 = vdwg.mxu0
        %1626 = vrot.lane.b32.xlu0 %v1616, 24
        %v1627 = vpop.permute.xlu0 %1626
        %1628 = vrot.lane.b32.xlu0 %v1621, 24
        %v1629 = vpop.permute.xlu0 %1628
        %vm1632 = vcmask 261312
        %1633 = vst.msk [vmem:[#allocation3] sm:$0xff] %vm1632, %v1627
        %vm1634 = vcmask 254144
        %1635 = vst.msk [vmem:[#allocation3 + $0x8] sm:$0x1] %vm1634, %v1629
        %v1636 = vld [vmem:[#allocation3] sm:$0xff]
        %v1637 = vld [vmem:[#allocation3 + $0x8] sm:$0x1]
        %v1638 = vld [vmem:[%s7] sm:$0xff]
        %v1639 = vld [vmem:[%s7 + $0x8] sm:$0xff]
        %v1640 = vld [vmem:[%s7 + $0x10] sm:$0xff]
        %v1641 = vld [vmem:[%s7 + $0x18] sm:$0xff]
        %v1643 = vsel %vm406, %v1636, 0
        %v1646 = vsel %vm406, %v1637, 0
        %1648 = vmatprep.subr.mxu0 0.0
        %1649 = vmatpush1.msra.mxu0 %v1638
        %1650 = vmatprep.subr.mxu0 0.0
        %1651 = vmatpush1.msra.mxu0 %v1639
        %1652 = vmatprep.subr.mxu0 0.0
        %1653 = vmatpush1.msra.mxu0 %v1640
        %1654 = vmatprep.subr.mxu0 0.0
        %1655 = vmatpush1.msra.mxu0 %v1641
        %1656 = vmatprep.subr.mxu0 0.0
        %1657 = vmatpush1.msra.mxu0 0.0
        %1658 = vmatprep.subr.mxu0 0.0
        %1659 = vmatpush1.msra.mxu0 0.0
        %1660 = vmatprep.subr.mxu0 0.0
        %1661 = vmatpush1.msra.mxu0 0.0
        %1662 = vmatprep.subr.mxu0 0.0
        %1663 = vmatpush1.msra.mxu0 0.0
        %1664 = vmatprep.subr.mxu0 0.0
        %1665 = vmatpush1.msra.mxu0 0.0
        %1666 = vmatprep.subr.mxu0 0.0
        %1667 = vmatpush1.msra.mxu0 0.0
        %1668 = vmatprep.subr.mxu0 0.0
        %1669 = vmatpush1.msra.mxu0 0.0
        %1670 = vmatprep.subr.mxu0 0.0
        %1671 = vmatpush1.msra.mxu0 0.0
        %1672 = vmatprep.subr.mxu0 0.0
        %1673 = vmatpush1.msra.mxu0 0.0
        %1674 = vmatprep.subr.mxu0 0.0
        %1675 = vmatpush1.msra.mxu0 0.0
        %1676 = vmatprep.subr.mxu0 0.0
        %1677 = vmatpush1.msra.mxu0 0.0
        %1678 = vmatprep.subr.mxu0 0.0
        %1679 = vmatpush1.msra.mxu0 0.0
        %1680 = vmatprep.subr.mxu0 0.0
        %1681 = vmatpush1.msra.mxu0 0.0
        %1682 = vmatprep.subr.mxu0 0.0
        %1683 = vmatpush1.msra.mxu0 0.0
        %1684 = vmatprep.subr.mxu0 0.0
        %1685 = vmatpush1.msra.mxu0 0.0
        %1686 = vmatprep.subr.mxu0 0.0
        %1687 = vmatpush1.msra.mxu0 0.0
        %1688 = vmatprep.subr.mxu0 0.0
        %1689 = vmatpush1.msra.mxu0 0.0
        %1690 = vmatprep.subr.mxu0 0.0
        %1691 = vmatpush1.msra.mxu0 0.0
        %1692 = vmatprep.subr.mxu0 0.0
        %1693 = vmatpush1.msra.mxu0 0.0
        %1694 = vmatprep.subr.mxu0 0.0
        %1695 = vmatpush1.msra.mxu0 0.0
        %1696 = vmatprep.subr.mxu0 0.0
        %1697 = vmatpush1.msra.mxu0 0.0
        %1698 = vmatprep.subr.mxu0 0.0
        %1699 = vmatpush1.msra.mxu0 0.0
        %1700 = vmatprep.subr.mxu0 0.0
        %1701 = vmatpush1.msra.mxu0 0.0
        %1702 = vmatprep.subr.mxu0 0.0
        %1703 = vmatpush1.msra.mxu0 0.0
        %1704 = vmatprep.subr.mxu0 0.0
        %1705 = vmatpush1.msra.mxu0 0.0
        %1706 = vmatprep.subr.mxu0 0.0
        %1707 = vmatpush1.msra.mxu0 0.0
        %1708 = vmatprep.subr.mxu0 0.0
        %1709 = vmatpush1.msra.mxu0 0.0
        %1710 = vmatprep.subr.mxu0 0.0
        %1711 = vmatpush1.msra.mxu0 0.0
        %1712 = vmatprep.mubr.f32.mxu0 0.0
        %1713 = vmatmul.mubr.f32.gmra.mrb[0].mxu0 %v1643
        %v1714 = vpop.f32.mrb[0].mxu0
        %v1715 = vadd.f32 0.0, %v1714
        %v1716 = vpop.f32.mrb[0].mxu0
        %1717 = vmatprep.mubr.f32.mxu0 0.0
        %1718 = vmatmul.mubr.f32.gmra.mrb[0].mxu0 %v1646
        %v1719 = vpop.f32.mrb[0].mxu0
        %v1720 = vadd.f32 0.0, %v1719
        %v1721 = vpop.f32.mrb[0].mxu0
        %1722 = vdwg.mxu0
        %1723 = vst.msk [vmem:[%s354] sm:$0xff] %vm406, %v1715
        %1724 = vst.msk [vmem:[%s354 + $0x8] sm:$0x1] %vm357, %v1720
        %p1725 = scmp.lt.s32.totalorder %s22, 1
        %s1726 = scalar_select %p1725, %s22, 1
        %s1727 = smul.addr %s1726, 2
        %s1728 = smul.addr %s1727, 8
        %s1729 = scalar_lea.vmem %s8, %s1728
        %s1730 = sand.u32 %s229, 1
        %s1731 = sand.u32 %s229, 1
        %s1732 = smul.addr %s1731, 64
        %s1733 = scalar_lea.vmem [#allocation6], %s1732
        // Predicated region
        $region57: #{tpu_custom_call.1} parent=51 // pred_check
          %p1734 = pneg %p213
        $region58: #{tpu_custom_call.1} parent=51 // pred_check_branch
          %1736 = sbr.rel (%p1734) target = $region60
        $region59: #{tpu_custom_call.1} parent=51 // pred_region
          _
        $region60: #{tpu_custom_call.1} parent=51 // pred_fallthru
          _
        // Predicated region
        $region61: #{tpu_custom_call.1} parent=51 // pred_check
          %p1737 = pneg %p239
        $region62: #{tpu_custom_call.1} parent=51 // pred_check_branch
          %1739 = sbr.rel (%p1737) target = $region64
        $region63: #{tpu_custom_call.1} parent=51 // pred_region
          %s1740 = smul.addr %s22, 2
          %s1741 = smul.addr %s1740, 8
          %s1742 = scalar_lea.vmem %s9, %s1741
          // Predicated region
          $region65: #{tpu_custom_call.1} parent=63 // pred_check
            _
          $region66: #{tpu_custom_call.1} parent=63 // pred_check_branch
            %1744 = sbr.rel (0) target = $region68
          $region67: #{tpu_custom_call.1} parent=63 // pred_region
            // Predicated region
            $region69: #{tpu_custom_call.1} parent=67 // pred_check
              _
            $region70: #{tpu_custom_call.1} parent=67 // pred_check_branch
              %1746 = sbr.rel (0) target = $region72
            $region71: #{tpu_custom_call.1} parent=67 // pred_region
              // Predicated region
              $region84: #{tpu_custom_call.1} parent=71 // pred_check
                _
              $region85: #{tpu_custom_call.1} parent=71 // pred_check_branch
                %1775 = sbr.rel (0) target = $region87
              $region86: #{tpu_custom_call.1} parent=71 // pred_region
                loop: start=0, step=1, limit=1
                $region88: #{tpu_custom_call.1} parent=86 // loop_pre_header
                  _
                $region89: #{tpu_custom_call.1} parent=86 // loop_header
                  %s1777 = sphi 0, %s1781
                  %p1778 = scmp.ge.s32.totalorder %s1777, 1
                  %s1782 = sphi %s1733, %s1733
                  %s1783 = sphi %s1742, %s1742
                $region90: #{tpu_custom_call.1} parent=86 // loop_header_branch
                  %1780 = sbr.rel (%p1778) target = $region94
                $region91: #{tpu_custom_call.1} parent=86 // loop_body
                  %v1784 = vld [vmem:[%s1782] sm:$0xff]
                  %1785 = vst [vmem:[%s1783] sm:$0xff] %v1784
                  %v1786 = vld [vmem:[%s1782 + $0x8] sm:$0xff]
                  %1787 = vst [vmem:[%s1783 + $0x8] sm:$0xff] %v1786
                  %v1788 = vld [vmem:[%s1782 + $0x10] sm:$0xff]
                  %1789 = vst [vmem:[%s1783 + $0x20] sm:$0xff] %v1788
                  %v1790 = vld [vmem:[%s1782 + $0x18] sm:$0xff]
                  %1791 = vst [vmem:[%s1783 + $0x28] sm:$0xff] %v1790
                  %v1792 = vld [vmem:[%s1782 + $0x20] sm:$0xff]
                  %1793 = vst [vmem:[%s1783 + $0x40] sm:$0xff] %v1792
                  %v1794 = vld [vmem:[%s1782 + $0x28] sm:$0xff]
                  %1795 = vst [vmem:[%s1783 + $0x48] sm:$0xff] %v1794
                  %v1796 = vld [vmem:[%s1782 + $0x30] sm:$0xff]
                  %1797 = vst [vmem:[%s1783 + $0x60] sm:$0xff] %v1796
                  %v1798 = vld [vmem:[%s1782 + $0x38] sm:$0xff]
                  %1799 = vst [vmem:[%s1783 + $0x68] sm:$0xff] %v1798
                $region92: #{tpu_custom_call.1} parent=86 // loop_footer
                  %s1781 = sadd.s32 1, %s1777
                $region93: #{tpu_custom_call.1} parent=86 // loop_footer_branch
                  %1776 = sbr.rel target = $region89
                $region94: #{tpu_custom_call.1} parent=86 // loop_exit
                  _
              $region87: #{tpu_custom_call.1} parent=71 // pred_fallthru
                _
              // Predicated region
              $region95: #{tpu_custom_call.1} parent=71 // pred_check
                _
              $region96: #{tpu_custom_call.1} parent=71 // pred_check_branch
                %1801 = sbr.rel target = $region98
              $region97: #{tpu_custom_call.1} parent=71 // pred_region
                _
              $region98: #{tpu_custom_call.1} parent=71 // pred_fallthru
                _
            $region72: #{tpu_custom_call.1} parent=67 // pred_fallthru
              _
            // Predicated region
            $region73: #{tpu_custom_call.1} parent=67 // pred_check
              _
            $region74: #{tpu_custom_call.1} parent=67 // pred_check_branch
              %1748 = sbr.rel target = $region76
            $region75: #{tpu_custom_call.1} parent=67 // pred_region
              loop: start=0, step=1, limit=1
              $region77: #{tpu_custom_call.1} parent=75 // loop_pre_header
                _
              $region78: #{tpu_custom_call.1} parent=75 // loop_header
                %s1751 = sphi 0, %s1755
                %p1752 = scmp.ge.s32.totalorder %s1751, 1
                %s1756 = sphi %s1733, %s1733
                %s1757 = sphi %s1742, %s1742
              $region79: #{tpu_custom_call.1} parent=75 // loop_header_branch
                %1754 = sbr.rel (%p1752) target = $region83
              $region80: #{tpu_custom_call.1} parent=75 // loop_body
                %v1758 = vld [vmem:[%s1756] sm:$0xff]
                %1759 = vst [vmem:[%s1757] sm:$0xff] %v1758
                %v1760 = vld [vmem:[%s1756 + $0x8] sm:$0xff]
                %1761 = vst [vmem:[%s1757 + $0x8] sm:$0xff] %v1760
                %v1762 = vld [vmem:[%s1756 + $0x10] sm:$0xff]
                %1763 = vst [vmem:[%s1757 + $0x20] sm:$0xff] %v1762
                %v1764 = vld [vmem:[%s1756 + $0x18] sm:$0xff]
                %1765 = vst [vmem:[%s1757 + $0x28] sm:$0xff] %v1764
                %v1766 = vld [vmem:[%s1756 + $0x20] sm:$0xff]
                %1767 = vst [vmem:[%s1757 + $0x40] sm:$0xff] %v1766
                %v1768 = vld [vmem:[%s1756 + $0x28] sm:$0xff]
                %1769 = vst [vmem:[%s1757 + $0x48] sm:$0xff] %v1768
                %v1770 = vld [vmem:[%s1756 + $0x30] sm:$0xff]
                %1771 = vst [vmem:[%s1757 + $0x60] sm:$0xff] %v1770
                %v1772 = vld [vmem:[%s1756 + $0x38] sm:$0xff]
                %1773 = vst [vmem:[%s1757 + $0x68] sm:$0xff] %v1772
              $region81: #{tpu_custom_call.1} parent=75 // loop_footer
                %s1755 = sadd.s32 1, %s1751
              $region82: #{tpu_custom_call.1} parent=75 // loop_footer_branch
                %1750 = sbr.rel target = $region78
              $region83: #{tpu_custom_call.1} parent=75 // loop_exit
                _
            $region76: #{tpu_custom_call.1} parent=67 // pred_fallthru
              _
          $region68: #{tpu_custom_call.1} parent=63 // pred_fallthru
            _
          %1802 = vnop
        $region64: #{tpu_custom_call.1} parent=51 // pred_fallthru
          _
      $region52: #{tpu_custom_call.1} parent=5 // pred_fallthru
        _
      %p1803 = scmp.le.s32.totalorder 2, %s17
      // Predicated region
      $region99: #{tpu_custom_call.1} parent=5 // pred_check
        %p1804 = pneg %p1803
      $region100: #{tpu_custom_call.1} parent=5 // pred_check_branch
        %1806 = sbr.rel (%p1804) target = $region102
      $region101: #{tpu_custom_call.1} parent=5 // pred_region
        %s1807 = ssub.s32 %s17, 2
        // Predicated region
        $region103: #{tpu_custom_call.1} parent=101 // pred_check
          %p1808 = pneg %p219
        $region104: #{tpu_custom_call.1} parent=101 // pred_check_branch
          %1810 = sbr.rel (%p1808) target = $region106
        $region105: #{tpu_custom_call.1} parent=101 // pred_region
          %p1811 = scmp.lt.s32.totalorder %s23, 1
          %s1812 = scalar_select %p1811, %s23, 1
          %s1813 = smul.addr %s1812, 2
          %s1814 = smul.addr %s1813, 8
          %s1815 = scalar_lea.vmem %s8, %s1814
        $region106: #{tpu_custom_call.1} parent=101 // pred_fallthru
          _
        // Predicated region
        $region107: #{tpu_custom_call.1} parent=101 // pred_check
          %p1816 = pneg %p245
        $region108: #{tpu_custom_call.1} parent=101 // pred_check_branch
          %1818 = sbr.rel (%p1816) target = $region110
        $region109: #{tpu_custom_call.1} parent=101 // pred_region
          %s1819 = sand.u32 %s230, 1
          %s1820 = sand.u32 %s230, 1
          %s1821 = smul.addr %s1820, 64
          %s1822 = scalar_lea.vmem [#allocation6], %s1821
        $region110: #{tpu_custom_call.1} parent=101 // pred_fallthru
          _
      $region102: #{tpu_custom_call.1} parent=5 // pred_fallthru
        _
    $region6: #{tpu_custom_call.1} parent=1 // loop_footer
      %s21 = sadd.s32 1, %s17
    $region7: #{tpu_custom_call.1} parent=1 // loop_footer_branch
      %16 = sbr.rel target = $region3
    $region8: #{tpu_custom_call.1} parent=1 // loop_exit
      _
    %1823 = vsyncpa [#allocation5], 1
    %s1824 = scalar_lea.sflag [#allocation5], 1
    %1825 = vsyncpa %s1824, 1

</llo_original>
